<compile_context>
chip_gen: v7x
topology: tpu7x:2x2x1
jax: 0.10.0
libtpu: 0.0.40
codegen_flags: <defaults>
</compile_context>

<pallas_src>
import functools

import jax
import jax.numpy as jnp
import numpy as np
from jax.experimental import pallas as pl
from jax.experimental.pallas import tpu as pltpu

WIDTH = 27          # fixed by the module (self.width = 27)
BN_EPS = 1e-5
_HIGHEST = jax.lax.Precision.HIGHEST


def _flat_conv_weight(w_pt):
    # PyTorch Conv1d weight (O, I, K) -> matmul weight (K*I, O) matching the
    # [tap_0 | ... | tap_{K-1}] shifted-concat activation layout.
    return jnp.transpose(w_pt, (2, 1, 0)).reshape(-1, w_pt.shape[0])


# ----------------------------------------------------------------------------
# Fused multi-layer recurrent kernel (single pallas_call for the whole net)
# ----------------------------------------------------------------------------
def _critic_kernel(*refs, num_layers, ksize, out_thresh):
    """Grid axis 0 == time (sequential).  Ref order (positional):

      xg0                      (1, BW, 3*H0)        hoisted layer-0 x-convs (+ biases + acond)
      [acond]                  (1, BW, sum H_{l>=1}) hoisted action-conv (+ ba + bc), layers >= 1
      aux                      (BW, 2*pad + Hlast)  [width-boundary masks | concentrate wmap]
      sel                      (B, BW)              per-batch 0/1 row selector for the head
      vecp                     (1, P)               [bnw_l|bnb_l]*L then [bg_l]_{l>=1}
      per layer l:  w_a, w_b   bf16 weights (l=0: whg_h, whc_h; l>=1: w_fused, whc_h)
      out                      (1, B, 1)            per-batch reward at the last two steps
      h_scratch_0..L-1         (BW, H_l) VMEM f32
    """
    pad = ksize // 2
    idx = 0
    xg0_ref = refs[idx]; idx += 1
    acond_ref = None
    if num_layers > 1:
        acond_ref = refs[idx]; idx += 1
    aux_ref = refs[idx]; idx += 1
    sel_ref = refs[idx]; idx += 1
    vecp_ref = refs[idx]; idx += 1
    wrefs = []
    for _ in range(num_layers):
        wrefs.append((refs[idx], refs[idx + 1])); idx += 2
    out_ref = refs[idx]; idx += 1
    h_scrs = refs[idx: idx + num_layers]

    hdims = [int(r.shape[1]) for r in h_scrs]
    bw = h_scrs[0].shape[0]
    nmask = 2 * pad
    t = pl.program_id(0)

    @pl.when(t == 0)
    def _init():
        for h_scr in h_scrs:
            h_scr[...] = jnp.zeros_like(h_scr)

    aux = aux_ref[...]                      # masks + wmap, resident in VMEM
    vecp = vecp_ref[...]
    acond = acond_ref[0] if num_layers > 1 else None

    def shifted(v, s):
        # v[p] -> v[p + s], zeroed where (p % width) + s leaves [0, width).
        # Masks are precomputed f32 0/1 columns of `aux` (no per-step iota/mod).
        if s == 0:
            return v
        col = (s - 1) if s > 0 else (pad + (-s) - 1)
        return jnp.roll(v, -s, axis=0) * aux[:, col:col + 1]

    def shifted_cat(v):
        # [tap_0 | ... | tap_{K-1}] along lanes; tap k == shift (k - pad).
        return jnp.concatenate([shifted(v, k - pad) for k in range(ksize)], axis=-1)

    def dot_bf16(a_f32, w_ref):
        # Single-pass bf16 MXU matmul with f32 accumulation.
        return jnp.dot(a_f32.astype(jnp.bfloat16), w_ref[...],
                       preferred_element_type=jnp.float32)

    inv_n = jnp.float32(1.0 / bw)
    bn_off = 0
    bg_off = 2 * sum(hdims)
    ac_off = 0
    prev = None
    for l in range(num_layers):
        hdim = hdims[l]
        h = h_scrs[l][...]
        w_a_ref, w_b_ref = wrefs[l]

        if l == 0:
            # x-side fully hoisted (biases + action-conv already folded in).
            xall = xg0_ref[0]                               # (BW, 3H0)
            hs = shifted_cat(h)
            gates = jax.nn.sigmoid(xall[:, :2 * hdim] + dot_bf16(hs, w_a_ref))
            xc = xall[:, 2 * hdim:]
        else:
            # Fused gates + candidate-x matmul: one MXU op on [prev | h].
            z = jnp.concatenate([prev, h], axis=-1)         # (BW, Cin_l + H_l)
            zcat = shifted_cat(z)                           # (BW, K*(Cin_l+H_l))
            fused = dot_bf16(zcat, w_a_ref)                 # (BW, 3H_l)
            bg = vecp[:, bg_off: bg_off + 2 * hdim]
            bg_off += 2 * hdim
            gates = jax.nn.sigmoid(fused[:, :2 * hdim] + bg)
            xc = fused[:, 2 * hdim:] + acond[:, ac_off: ac_off + hdim]
            ac_off += hdim

        reset = gates[:, :hdim]
        update = gates[:, hdim:]
        rh = shifted_cat(reset * h)                         # data-dependent 2nd matmul
        cnm = xc + dot_bf16(rh, w_b_ref)

        pre = (1.0 - update) * h + update * cnm

        # Mish = x * tanh(softplus(x));  tanh(softplus(x)) = e(e+2)/(e(e+2)+2).
        # One EUP exp + one approximate reciprocal (torch softplus threshold 20).
        e = jnp.exp(jnp.minimum(pre, 20.0))
        u = e * (e + 2.0)
        act = jnp.where(pre > 20.0, pre,
                        pre * (u * pl.reciprocal(u + 2.0, approx=True)))

        # BatchNorm1d (training-mode batch stats) with a single fused reduce.
        sums = jnp.sum(jnp.concatenate([act, act * act], axis=-1),
                       axis=0, keepdims=True)               # (1, 2H)
        mean = sums[:, :hdim] * inv_n
        var = jnp.maximum(sums[:, hdim:] * inv_n - mean * mean, 0.0)
        bnw = vecp[:, bn_off: bn_off + hdim]
        bnb = vecp[:, bn_off + hdim: bn_off + 2 * hdim]
        bn_off += 2 * hdim
        h_next = (act - mean) * jax.lax.rsqrt(var + BN_EPS) * bnw + bnb

        h_scrs[l][...] = h_next
        prev = h_next

    # "concentrate" head folded into the last two steps only (dead stores at
    # earlier steps are skipped entirely).
    @pl.when(t >= out_thresh)
    def _head():
        wmap = aux[:, nmask:]                                # (BW, Hlast)
        scored = prev * wmap                                 # f32, exact
        per_batch = jnp.dot(sel_ref[...], scored,
                            preferred_element_type=jnp.float32)   # (B, Hlast)
        out_ref[0] = jnp.sum(per_batch, axis=1, keepdims=True)    # (B, 1)


# ----------------------------------------------------------------------------
# Wrapper
# ----------------------------------------------------------------------------
def pallas_critic_forward(x_btcw, layers, w_lin, b_lin):
    """x_btcw: (B, T, C, 27) — PyTorch layout of Critic.forward input."""
    batch, seq_len, chan, width = x_btcw.shape
    bw = batch * width
    ksize = layers[0]["wg"].shape[-1]
    pad = ksize // 2
    num_layers = len(layers)
    hidden_dims = [int(p["bn_w"].shape[0]) for p in layers]
    h0 = hidden_dims[0]
    h_last = hidden_dims[-1]

    # kernel layout (T, B*W, C): row = b*width + w, channels on lanes
    x_k = jnp.transpose(x_btcw, (1, 0, 3, 2)).reshape(seq_len, bw, chan)
    a_k = x_k[:, :, -8:]                               # action = last 8 channels

    # ---- hoisted, time-parallel precompute (bf16 matmuls, f32 accumulation) ----
    pos3 = (jnp.arange(bw) % width)[None, :, None]

    def shifted_all(v, s):
        if s == 0:
            return v
        mask = (pos3 < width - s) if s > 0 else (pos3 >= -s)
        return jnp.where(mask, jnp.roll(v, -s, axis=1), 0.0)

    def shifted_cat_all(v):
        return jnp.concatenate([shifted_all(v, k - pad) for k in range(ksize)], axis=-1)

    xs_all = shifted_cat_all(x_k).astype(jnp.bfloat16)   # (T, BW, K*Cin)
    as_all = shifted_cat_all(a_k).astype(jnp.bfloat16)   # (T, BW, K*8)

    # One consolidated action-conv einsum across ALL layers (+ bc + ba folded).
    wa_cat = jnp.concatenate([_flat_conv_weight(p["wa"]) for p in layers], axis=-1)
    ab_cat = jnp.concatenate([p["ba"] + p["bc"] for p in layers])
    acond_all = (jnp.einsum('tbk,kh->tbh', as_all, wa_cat.astype(jnp.bfloat16),
                            preferred_element_type=jnp.float32) + ab_cat)

    # Layer-0 x-side convs for all T at once, biases + action-conv folded in.
    wx3_0 = jnp.concatenate(
        [_flat_conv_weight(layers[0]["wg"][:, :chan, :]),
         _flat_conv_weight(layers[0]["wc"][:, :chan, :])], axis=-1)     # (K*Cin, 3H0)
    xg0 = jnp.einsum('tbk,ko->tbo', xs_all, wx3_0.astype(jnp.bfloat16),
                     preferred_element_type=jnp.float32)
    xg0 = xg0.at[..., :2 * h0].add(layers[0]["bg"])
    xg0 = xg0.at[..., 2 * h0:].add(acond_all[..., :h0])

    time_inputs = [xg0]
    if num_layers > 1:
        time_inputs.append(acond_all[..., h0:])          # (T, BW, sum H_{l>=1})

    # ---- resident params (constant index map => DMA'd once) ----
    posr = (jnp.arange(bw) % width)[:, None]
    mask_cols = [(posr < width - s).astype(jnp.float32) for s in range(1, pad + 1)]
    mask_cols += [(posr >= s).astype(jnp.float32) for s in range(1, pad + 1)]
    # concentrate weight remapped to the kernel's (row=b*W+w, lane=c) layout
    wmap = jnp.tile(w_lin.reshape(h_last, width).T, (batch, 1))          # (BW, Hlast)
    aux = jnp.concatenate(mask_cols + [wmap], axis=-1)                   # (BW, 2pad+Hlast)

    sel = (jnp.arange(bw)[None, :] // width ==
           jnp.arange(batch)[:, None]).astype(jnp.float32)               # (B, BW)

    vec_parts = []
    for p in layers:
        vec_parts += [p["bn_w"], p["bn_b"]]
    for p in layers[1:]:
        vec_parts.append(p["bg"])
    vecp = jnp.concatenate(vec_parts).reshape(1, -1)

    weight_inputs = []
    cin = chan
    for l, p in enumerate(layers):
        h = hidden_dims[l]
        whc_h = _flat_conv_weight(p["wc"][:, cin:, :]).astype(jnp.bfloat16)   # (K*H, H)
        if l == 0:
            whg_h = _flat_conv_weight(p["wg"][:, cin:, :]).astype(jnp.bfloat16)  # (K*H, 2H)
            weight_inputs += [whg_h, whc_h]
        else:
            # Block-stacked fused weight: [[wxg|wxc], [whg|0]] -> (K*(cin+H), 3H)
            wg_full = _flat_conv_weight(p["wg"])                               # (K*(cin+H), 2H)
            wc_k = jnp.transpose(p["wc"], (2, 1, 0))                           # (K, cin+H, H)
            wc_k = wc_k.at[:, cin:, :].set(0.0)                                # zero h-rows
            wc_xpad = wc_k.reshape(-1, h)                                      # (K*(cin+H), H)
            w_fused = jnp.concatenate([wg_full, wc_xpad], axis=-1).astype(jnp.bfloat16)
            weight_inputs += [w_fused, whc_h]
        cin = h

    resident = [aux, sel, vecp] + weight_inputs

    out_slots = min(seq_len, 2)
    out_thresh = max(seq_len - 2, 0)

    def _stream_spec(arr):
        c = arr.shape[-1]
        return pl.BlockSpec((1, bw, c), lambda t: (t, 0, 0))

    def _const_spec(arr):
        nd = arr.ndim
        return pl.BlockSpec(arr.shape, lambda t, _nd=nd: (0,) * _nd)

    in_specs = ([_stream_spec(a) for a in time_inputs]
                + [_const_spec(a) for a in resident])
    out_spec = pl.BlockSpec((1, batch, 1),
                            lambda t: (jnp.maximum(t - out_thresh, 0), 0, 0))

    kernel = functools.partial(_critic_kernel, num_layers=num_layers,
                               ksize=ksize, out_thresh=out_thresh)

    # NOTE: time is inherently sequential ("arbitrary"); on v7x a leading
    # "parallel" grid axis over independent Critic instances would be needed to
    # use the second TensorCore — not applicable to a single instance.
    rew = pl.pallas_call(
        kernel,
        out_shape=jax.ShapeDtypeStruct((out_slots, batch, 1), jnp.float32),
        grid=(seq_len,),
        in_specs=in_specs,
        out_specs=out_spec,
        scratch_shapes=[pltpu.VMEM((bw, h), jnp.float32) for h in hidden_dims],
        compiler_params=pltpu.CompilerParams(dimension_semantics=("arbitrary",)),
    )(*time_inputs, *resident)

    rew = rew[:, :, 0]                                     # (out_slots, B)
    if seq_len > 1:
        # b_lin cancels exactly in the difference.
        return 0.99 * (rew[1] - rew[0])
    return rew[0] + b_lin


# ----------------------------------------------------------------------------
# Deterministic parameter init (PyTorch shapes; synthetic values)
# ----------------------------------------------------------------------------
def init_params(key, input_dim, hidden_dims, ksize, width):
    layers = []
    cin = input_dim
    for h in hidden_dims:
        key, *ks = jax.random.split(key, 7)
        fan_g = (cin + h) * ksize
        fan_a = 8 * ksize
        layers.append(dict(
            wg=jax.random.uniform(ks[0], (2 * h, cin + h, ksize), minval=-1., maxval=1.) / np.sqrt(fan_g),
            bg=jax.random.uniform(ks[1], (2 * h,), minval=-1., maxval=1.) / np.sqrt(fan_g),
            wc=jax.random.uniform(ks[2], (h, cin + h, ksize), minval=-1., maxval=1.) / np.sqrt(fan_g),
            bc=jax.random.uniform(ks[3], (h,), minval=-1., maxval=1.) / np.sqrt(fan_g),
            wa=jax.random.uniform(ks[4], (h, 8, ksize), minval=-1., maxval=1.) / np.sqrt(fan_a),
            ba=jax.random.uniform(ks[5], (h,), minval=-1., maxval=1.) / np.sqrt(fan_a),
            bn_w=jnp.ones((h,), jnp.float32),
            bn_b=jnp.zeros((h,), jnp.float32),
        ))
        cin = h
    key, k1, k2 = jax.random.split(key, 3)
    f = hidden_dims[-1] * width
    w_lin = jax.random.uniform(k1, (f,), minval=-1., maxval=1.) / np.sqrt(f)
    b_lin = jax.random.uniform(k2, (), minval=-1., maxval=1.) / np.sqrt(f)
    return layers, w_lin, b_lin


# ----------------------------------------------------------------------------
# Pure-JAX reference (lax.conv, f32 HIGHEST) for correctness checking
# ----------------------------------------------------------------------------
def _softplus(x):
    return jnp.where(x > 20.0, x, jnp.log1p(jnp.exp(jnp.minimum(x, 20.0))))


def _ref_cell(x, h, a, p):
    pad = p["wg"].shape[-1] // 2

    def conv(inp, w, b):
        out = jax.lax.conv_general_dilated(
            inp, w, window_strides=(1,), padding=[(pad, pad)],
            dimension_numbers=("NCH", "OIH", "NCH"), precision=_HIGHEST)
        return out + b[None, :, None]

    hdim = h.shape[1]
    gates = conv(jnp.concatenate([x, h], axis=1), p["wg"], p["bg"])
    reset = jax.nn.sigmoid(gates[:, :hdim])
    update = jax.nn.sigmoid(gates[:, hdim:])
    cnm = (conv(jnp.concatenate([x, reset * h], axis=1), p["wc"], p["bc"])
           + conv(a, p["wa"], p["ba"]))
    pre = (1.0 - update) * h + update * cnm
    act = pre * jnp.tanh(_softplus(pre))
    mean = act.mean(axis=(0, 2), keepdims=True)
    var = ((act - mean) ** 2).mean(axis=(0, 2), keepdims=True)
    hn = (act - mean) * jax.lax.rsqrt(var + BN_EPS)
    return hn * p["bn_w"][None, :, None] + p["bn_b"][None, :, None]


def ref_forward(x_btcw, layers, w_lin, b_lin):
    batch, seq_len, _, width = x_btcw.shape
    action = x_btcw[:, :, -8:, :]
    cur = x_btcw
    for p in layers:
        h = jnp.zeros((batch, p["bn_w"].shape[0], width), jnp.float32)
        outs = []
        for t in range(seq_len):
            h = _ref_cell(cur[:, t], h, action[:, t], p)
            outs.append(h)
        cur = jnp.stack(outs, axis=1)                       # (B, T, H, W)
    feats = cur.reshape(batch * seq_len, -1)
    reward = (feats @ w_lin[:, None] + b_lin).reshape(batch, seq_len)
    if seq_len > 1:
        return 0.99 * (reward[:, -1] - reward[:, -2])
    return reward[:, -1]


# ----------------------------------------------------------------------------
if __name__ == "__main__":
    key = jax.random.PRNGKey(0)
    B, T, C = 2, 4, 12           # input_tensor (b, t, c, 27); last 8 channels = action
    H, K, NUM_LAYERS = 16, 3, 2

    key, kx = jax.random.split(key)
    x = jax.random.normal(kx, (B, T, C, WIDTH), dtype=jnp.float32)
    layers, w_lin, b_lin = init_params(key, C, [H] * NUM_LAYERS, K, WIDTH)

    fwd = jax.jit(lambda inp: pallas_critic_forward(inp, layers, w_lin, b_lin))
    out = jax.block_until_ready(fwd(x))

    ref = ref_forward(x, layers, w_lin, b_lin)
    # bf16 MXU operands + approximate reciprocal in Mish => compare with a
    # correspondingly looser (but still tight at these magnitudes) tolerance.
    if not np.allclose(np.asarray(out), np.asarray(ref), rtol=5e-2, atol=5e-2):
        raise AssertionError(f"Pallas/reference mismatch: {out} vs {ref}")

    # TODO(synk): judgeNet / get_punish is undefined in the source module and
    # unused by forward(); mask/target branches are the non-default path of
    # forward() and are not exercised here.
    print("KERNEL_OK")
</pallas_src>

<mosaic_0001>
module attributes {stable_mosaic.version = 11 : i64} {
  func.func @_critic_kernel(%arg0: i32, %arg1: memref<1x54x48xf32, #tpu.memory_space<vmem>>, %arg2: memref<1x54x16xf32, #tpu.memory_space<vmem>>, %arg3: memref<54x18xf32, #tpu.memory_space<vmem>>, %arg4: memref<2x54xf32, #tpu.memory_space<vmem>>, %arg5: memref<1x96xf32, #tpu.memory_space<vmem>>, %arg6: memref<48x32xbf16, #tpu.memory_space<vmem>>, %arg7: memref<48x16xbf16, #tpu.memory_space<vmem>>, %arg8: memref<96x48xbf16, #tpu.memory_space<vmem>>, %arg9: memref<48x16xbf16, #tpu.memory_space<vmem>>, %arg10: memref<1x2x1xf32, #tpu.memory_space<vmem>>, %arg11: memref<54x16xf32, #tpu.memory_space<vmem>>, %arg12: memref<54x16xf32, #tpu.memory_space<vmem>>) attributes {dimension_semantics = [#tpu.dimension_semantics<arbitrary>], iteration_bounds = array<i64: 4>, scalar_prefetch = 0 : i64, scratch_operands = 2 : i64, tpu.core_type = #tpu.core_type<tc>, window_params = [{transform_indices = @transform_0, window_bounds = array<i64: 1, 54, 48>}, {transform_indices = @transform_1, window_bounds = array<i64: 1, 54, 16>}, {pipeline_mode = #tpu.pipeline_mode<synchronous>, transform_indices = @transform_2, window_bounds = array<i64: 54, 18>}, {pipeline_mode = #tpu.pipeline_mode<synchronous>, transform_indices = @transform_3, window_bounds = array<i64: 2, 54>}, {pipeline_mode = #tpu.pipeline_mode<synchronous>, transform_indices = @transform_4, window_bounds = array<i64: 1, 96>}, {pipeline_mode = #tpu.pipeline_mode<synchronous>, transform_indices = @transform_5, window_bounds = array<i64: 48, 32>}, {pipeline_mode = #tpu.pipeline_mode<synchronous>, transform_indices = @transform_6, window_bounds = array<i64: 48, 16>}, {pipeline_mode = #tpu.pipeline_mode<synchronous>, transform_indices = @transform_7, window_bounds = array<i64: 96, 48>}, {pipeline_mode = #tpu.pipeline_mode<synchronous>, transform_indices = @transform_8, window_bounds = array<i64: 48, 16>}, {transform_indices = @transform_9, window_bounds = array<i64: 1, 2, 1>}]} {
    %c0_i32 = arith.constant 0 : i32
    %0 = arith.cmpi eq, %arg0, %c0_i32 : i32
    %1 = arith.extui %0 : i1 to i32
    %c0_i32_0 = arith.constant 0 : i32
    %2 = arith.cmpi ne, %1, %c0_i32_0 : i32
    scf.if %2 {
      %cst_52 = arith.constant 0.000000e+00 : f32
      %200 = vector.broadcast %cst_52 : f32 to vector<54x16xf32>
      %c0_53 = arith.constant 0 : index
      %c0_54 = arith.constant 0 : index
      %201 = vector.load %arg11[%c0_53, %c0_54] : memref<54x16xf32, #tpu.memory_space<vmem>>, vector<54x16xf32>
      tpu.vector_store %arg11[%c0_53, %c0_54], %200 {strides = array<i32>} : memref<54x16xf32, #tpu.memory_space<vmem>>, vector<54x16xf32>,
      %cst_55 = arith.constant 0.000000e+00 : f32
      %202 = vector.broadcast %cst_55 : f32 to vector<54x16xf32>
      %c0_56 = arith.constant 0 : index
      %c0_57 = arith.constant 0 : index
      %203 = vector.load %arg12[%c0_56, %c0_57] : memref<54x16xf32, #tpu.memory_space<vmem>>, vector<54x16xf32>
      tpu.vector_store %arg12[%c0_56, %c0_57], %202 {strides = array<i32>} : memref<54x16xf32, #tpu.memory_space<vmem>>, vector<54x16xf32>,
    } else {
    }
    %c0 = arith.constant 0 : index
    %c0_1 = arith.constant 0 : index
    %3 = vector.load %arg3[%c0, %c0_1] : memref<54x18xf32, #tpu.memory_space<vmem>>, vector<54x18xf32>
    %c0_2 = arith.constant 0 : index
    %c0_3 = arith.constant 0 : index
    %4 = vector.load %arg5[%c0_2, %c0_3] : memref<1x96xf32, #tpu.memory_space<vmem>>, vector<1x96xf32>
    %c0_4 = arith.constant 0 : index
    %c0_5 = arith.constant 0 : index
    %c0_6 = arith.constant 0 : index
    %5 = vector.load %arg2[%c0_4, %c0_5, %c0_6] : memref<1x54x16xf32, #tpu.memory_space<vmem>>, vector<1x54x16xf32>
    %6 = vector.shape_cast %5 : vector<1x54x16xf32> to vector<54x16xf32>
    %c0_7 = arith.constant 0 : index
    %c0_8 = arith.constant 0 : index
    %7 = vector.load %arg11[%c0_7, %c0_8] : memref<54x16xf32, #tpu.memory_space<vmem>>, vector<54x16xf32>
    %c0_9 = arith.constant 0 : index
    %c0_10 = arith.constant 0 : index
    %c0_11 = arith.constant 0 : index
    %8 = vector.load %arg1[%c0_9, %c0_10, %c0_11] : memref<1x54x48xf32, #tpu.memory_space<vmem>>, vector<1x54x48xf32>
    %9 = vector.shape_cast %8 : vector<1x54x48xf32> to vector<54x48xf32>
    %10 = vector.extract_strided_slice %7 {offsets = [53, 0], sizes = [1, 16], strides = [1, 1]} : vector<54x16xf32> to vector<1x16xf32>
    %11 = vector.extract_strided_slice %7 {offsets = [0, 0], sizes = [53, 16], strides = [1, 1]} : vector<54x16xf32> to vector<53x16xf32>
    %12 = tpu.concatenate %10, %11 in 0 : vector<1x16xf32>, vector<53x16xf32> -> vector<54x16xf32>
    %13 = vector.extract_strided_slice %3 {offsets = [0, 1], sizes = [54, 1], strides = [1, 1]} : vector<54x18xf32> to vector<54x1xf32>
    %14 = vector.broadcast %13 : vector<54x1xf32> to vector<54x16xf32>
    %15 = arith.mulf %12, %14 : vector<54x16xf32>
    %16 = vector.extract_strided_slice %7 {offsets = [1, 0], sizes = [53, 16], strides = [1, 1]} : vector<54x16xf32> to vector<53x16xf32>
    %17 = vector.extract_strided_slice %7 {offsets = [0, 0], sizes = [1, 16], strides = [1, 1]} : vector<54x16xf32> to vector<1x16xf32>
    %18 = tpu.concatenate %16, %17 in 0 : vector<53x16xf32>, vector<1x16xf32> -> vector<54x16xf32>
    %19 = vector.extract_strided_slice %3 {offsets = [0, 0], sizes = [54, 1], strides = [1, 1]} : vector<54x18xf32> to vector<54x1xf32>
    %20 = vector.broadcast %19 : vector<54x1xf32> to vector<54x16xf32>
    %21 = arith.mulf %18, %20 : vector<54x16xf32>
    %22 = tpu.concatenate %15, %7, %21 in 1 : vector<54x16xf32>, vector<54x16xf32>, vector<54x16xf32> -> vector<54x48xf32>
    %23 = vector.extract_strided_slice %9 {offsets = [0, 0], sizes = [54, 32], strides = [1, 1]} : vector<54x48xf32> to vector<54x32xf32>
    %24 = arith.truncf %22 : vector<54x48xf32> to vector<54x48xbf16>
    %c0_12 = arith.constant 0 : index
    %c0_13 = arith.constant 0 : index
    %25 = vector.load %arg6[%c0_12, %c0_13] : memref<48x32xbf16, #tpu.memory_space<vmem>>, vector<48x32xbf16>
    %cst = arith.constant dense<0.000000e+00> : vector<54x32xf32>
    %26 = tpu.matmul %24, %25, %cst {dimension_numbers = #tpu.dot_dimension_numbers<[1], [0], [0], [1], [0, 0, 1, 1], [], []>} : vector<54x48xbf16>, vector<48x32xbf16>, vector<54x32xf32> -> vector<54x32xf32>
    %27 = arith.addf %23, %26 : vector<54x32xf32>
    %28 = arith.negf %27 : vector<54x32xf32>
    %29 = math.exp %28 : vector<54x32xf32>
    %cst_14 = arith.constant 1.000000e+00 : f32
    %30 = vector.broadcast %cst_14 : f32 to vector<54x32xf32>
    %31 = arith.addf %30, %29 : vector<54x32xf32>
    %32 = arith.divf %30, %31 : vector<54x32xf32>
    %33 = vector.extract_strided_slice %9 {offsets = [0, 32], sizes = [54, 16], strides = [1, 1]} : vector<54x48xf32> to vector<54x16xf32>
    %34 = vector.extract_strided_slice %32 {offsets = [0, 0], sizes = [54, 16], strides = [1, 1]} : vector<54x32xf32> to vector<54x16xf32>
    %35 = vector.extract_strided_slice %32 {offsets = [0, 16], sizes = [54, 16], strides = [1, 1]} : vector<54x32xf32> to vector<54x16xf32>
    %36 = arith.mulf %34, %7 : vector<54x16xf32>
    %37 = vector.extract_strided_slice %36 {offsets = [53, 0], sizes = [1, 16], strides = [1, 1]} : vector<54x16xf32> to vector<1x16xf32>
    %38 = vector.extract_strided_slice %36 {offsets = [0, 0], sizes = [53, 16], strides = [1, 1]} : vector<54x16xf32> to vector<53x16xf32>
    %39 = tpu.concatenate %37, %38 in 0 : vector<1x16xf32>, vector<53x16xf32> -> vector<54x16xf32>
    %40 = vector.extract_strided_slice %3 {offsets = [0, 1], sizes = [54, 1], strides = [1, 1]} : vector<54x18xf32> to vector<54x1xf32>
    %41 = vector.broadcast %40 : vector<54x1xf32> to vector<54x16xf32>
    %42 = arith.mulf %39, %41 : vector<54x16xf32>
    %43 = vector.extract_strided_slice %36 {offsets = [1, 0], sizes = [53, 16], strides = [1, 1]} : vector<54x16xf32> to vector<53x16xf32>
    %44 = vector.extract_strided_slice %36 {offsets = [0, 0], sizes = [1, 16], strides = [1, 1]} : vector<54x16xf32> to vector<1x16xf32>
    %45 = tpu.concatenate %43, %44 in 0 : vector<53x16xf32>, vector<1x16xf32> -> vector<54x16xf32>
    %46 = vector.extract_strided_slice %3 {offsets = [0, 0], sizes = [54, 1], strides = [1, 1]} : vector<54x18xf32> to vector<54x1xf32>
    %47 = vector.broadcast %46 : vector<54x1xf32> to vector<54x16xf32>
    %48 = arith.mulf %45, %47 : vector<54x16xf32>
    %49 = tpu.concatenate %42, %36, %48 in 1 : vector<54x16xf32>, vector<54x16xf32>, vector<54x16xf32> -> vector<54x48xf32>
    %50 = arith.truncf %49 : vector<54x48xf32> to vector<54x48xbf16>
    %c0_15 = arith.constant 0 : index
    %c0_16 = arith.constant 0 : index
    %51 = vector.load %arg7[%c0_15, %c0_16] : memref<48x16xbf16, #tpu.memory_space<vmem>>, vector<48x16xbf16>
    %cst_17 = arith.constant dense<0.000000e+00> : vector<54x16xf32>
    %52 = tpu.matmul %50, %51, %cst_17 {dimension_numbers = #tpu.dot_dimension_numbers<[1], [0], [0], [1], [0, 0, 1, 1], [], []>} : vector<54x48xbf16>, vector<48x16xbf16>, vector<54x16xf32> -> vector<54x16xf32>
    %53 = arith.addf %33, %52 : vector<54x16xf32>
    %cst_18 = arith.constant 1.000000e+00 : f32
    %54 = vector.broadcast %cst_18 : f32 to vector<54x16xf32>
    %55 = arith.subf %54, %35 : vector<54x16xf32>
    %56 = arith.mulf %55, %7 : vector<54x16xf32>
    %57 = arith.mulf %35, %53 : vector<54x16xf32>
    %58 = arith.addf %56, %57 : vector<54x16xf32>
    %cst_19 = arith.constant 2.000000e+01 : f32
    %59 = vector.broadcast %cst_19 : f32 to vector<54x16xf32>
    %60 = arith.minimumf %58, %59 : vector<54x16xf32>
    %61 = math.exp %60 : vector<54x16xf32>
    %cst_20 = arith.constant 2.000000e+00 : f32
    %62 = vector.broadcast %cst_20 : f32 to vector<54x16xf32>
    %63 = arith.addf %61, %62 : vector<54x16xf32>
    %64 = arith.mulf %61, %63 : vector<54x16xf32>
    %cst_21 = arith.constant 2.000000e+01 : f32
    %65 = vector.broadcast %cst_21 : f32 to vector<54x16xf32>
    %66 = arith.cmpf ogt, %58, %65 : vector<54x16xf32>
    %cst_22 = arith.constant 2.000000e+00 : f32
    %67 = vector.broadcast %cst_22 : f32 to vector<54x16xf32>
    %68 = arith.addf %64, %67 : vector<54x16xf32>
    %69 = tpu.reciprocal %68 {approx = true} : vector<54x16xf32> -> vector<54x16xf32>
    %70 = arith.mulf %64, %69 : vector<54x16xf32>
    %71 = arith.mulf %58, %70 : vector<54x16xf32>
    %72 = arith.select %66, %58, %71 : vector<54x16xi1>, vector<54x16xf32>
    %73 = arith.mulf %72, %72 : vector<54x16xf32>
    %74 = tpu.concatenate %72, %73 in 1 : vector<54x16xf32>, vector<54x16xf32> -> vector<54x32xf32>
    %cst_23 = arith.constant dense<0.000000e+00> : vector<32xf32>
    %75 = vector.multi_reduction <add>, %74, %cst_23 [0] : vector<54x32xf32> to vector<32xf32>
    %76 = vector.shape_cast %75 : vector<32xf32> to vector<1x32xf32>
    %77 = vector.extract_strided_slice %76 {offsets = [0, 0], sizes = [1, 16], strides = [1, 1]} : vector<1x32xf32> to vector<1x16xf32>
    %cst_24 = arith.constant 0.0185185187 : f32
    %78 = vector.broadcast %cst_24 : f32 to vector<1x16xf32>
    %79 = arith.mulf %77, %78 : vector<1x16xf32>
    %80 = vector.extract_strided_slice %76 {offsets = [0, 16], sizes = [1, 16], strides = [1, 1]} : vector<1x32xf32> to vector<1x16xf32>
    %cst_25 = arith.constant 0.0185185187 : f32
    %81 = vector.broadcast %cst_25 : f32 to vector<1x16xf32>
    %82 = arith.mulf %80, %81 : vector<1x16xf32>
    %83 = arith.mulf %79, %79 : vector<1x16xf32>
    %84 = arith.subf %82, %83 : vector<1x16xf32>
    %cst_26 = arith.constant 0.000000e+00 : f32
    %85 = vector.broadcast %cst_26 : f32 to vector<1x16xf32>
    %86 = arith.maximumf %84, %85 : vector<1x16xf32>
    %87 = vector.extract_strided_slice %4 {offsets = [0, 0], sizes = [1, 16], strides = [1, 1]} : vector<1x96xf32> to vector<1x16xf32>
    %88 = vector.extract_strided_slice %4 {offsets = [0, 16], sizes = [1, 16], strides = [1, 1]} : vector<1x96xf32> to vector<1x16xf32>
    %89 = vector.broadcast %79 : vector<1x16xf32> to vector<54x16xf32>
    %90 = arith.subf %72, %89 : vector<54x16xf32>
    %cst_27 = arith.constant 9.99999974E-6 : f32
    %91 = vector.broadcast %cst_27 : f32 to vector<1x16xf32>
    %92 = arith.addf %86, %91 : vector<1x16xf32>
    %93 = math.rsqrt %92 : vector<1x16xf32>
    %94 = vector.broadcast %93 : vector<1x16xf32> to vector<54x16xf32>
    %95 = arith.mulf %90, %94 : vector<54x16xf32>
    %96 = vector.broadcast %87 : vector<1x16xf32> to vector<54x16xf32>
    %97 = arith.mulf %95, %96 : vector<54x16xf32>
    %98 = vector.broadcast %88 : vector<1x16xf32> to vector<54x16xf32>
    %99 = arith.addf %97, %98 : vector<54x16xf32>
    %c0_28 = arith.constant 0 : index
    %c0_29 = arith.constant 0 : index
    %100 = vector.load %arg11[%c0_28, %c0_29] : memref<54x16xf32, #tpu.memory_space<vmem>>, vector<54x16xf32>
    tpu.vector_store %arg11[%c0_28, %c0_29], %99 {strides = array<i32>} : memref<54x16xf32, #tpu.memory_space<vmem>>, vector<54x16xf32>,
    %c0_30 = arith.constant 0 : index
    %c0_31 = arith.constant 0 : index
    %101 = vector.load %arg12[%c0_30, %c0_31] : memref<54x16xf32, #tpu.memory_space<vmem>>, vector<54x16xf32>
    %102 = tpu.concatenate %99, %101 in 1 : vector<54x16xf32>, vector<54x16xf32> -> vector<54x32xf32>
    %103 = vector.extract_strided_slice %102 {offsets = [53, 0], sizes = [1, 32], strides = [1, 1]} : vector<54x32xf32> to vector<1x32xf32>
    %104 = vector.extract_strided_slice %102 {offsets = [0, 0], sizes = [53, 32], strides = [1, 1]} : vector<54x32xf32> to vector<53x32xf32>
    %105 = tpu.concatenate %103, %104 in 0 : vector<1x32xf32>, vector<53x32xf32> -> vector<54x32xf32>
    %106 = vector.extract_strided_slice %3 {offsets = [0, 1], sizes = [54, 1], strides = [1, 1]} : vector<54x18xf32> to vector<54x1xf32>
    %107 = vector.broadcast %106 : vector<54x1xf32> to vector<54x32xf32>
    %108 = arith.mulf %105, %107 : vector<54x32xf32>
    %109 = vector.extract_strided_slice %102 {offsets = [1, 0], sizes = [53, 32], strides = [1, 1]} : vector<54x32xf32> to vector<53x32xf32>
    %110 = vector.extract_strided_slice %102 {offsets = [0, 0], sizes = [1, 32], strides = [1, 1]} : vector<54x32xf32> to vector<1x32xf32>
    %111 = tpu.concatenate %109, %110 in 0 : vector<53x32xf32>, vector<1x32xf32> -> vector<54x32xf32>
    %112 = vector.extract_strided_slice %3 {offsets = [0, 0], sizes = [54, 1], strides = [1, 1]} : vector<54x18xf32> to vector<54x1xf32>
    %113 = vector.broadcast %112 : vector<54x1xf32> to vector<54x32xf32>
    %114 = arith.mulf %111, %113 : vector<54x32xf32>
    %115 = tpu.concatenate %108, %102, %114 in 1 : vector<54x32xf32>, vector<54x32xf32>, vector<54x32xf32> -> vector<54x96xf32>
    %116 = arith.truncf %115 : vector<54x96xf32> to vector<54x96xbf16>
    %c0_32 = arith.constant 0 : index
    %c0_33 = arith.constant 0 : index
    %117 = vector.load %arg8[%c0_32, %c0_33] : memref<96x48xbf16, #tpu.memory_space<vmem>>, vector<96x48xbf16>
    %cst_34 = arith.constant dense<0.000000e+00> : vector<54x48xf32>
    %118 = tpu.matmul %116, %117, %cst_34 {dimension_numbers = #tpu.dot_dimension_numbers<[1], [0], [0], [1], [0, 0, 1, 1], [], []>} : vector<54x96xbf16>, vector<96x48xbf16>, vector<54x48xf32> -> vector<54x48xf32>
    %119 = vector.extract_strided_slice %4 {offsets = [0, 64], sizes = [1, 32], strides = [1, 1]} : vector<1x96xf32> to vector<1x32xf32>
    %120 = vector.extract_strided_slice %118 {offsets = [0, 0], sizes = [54, 32], strides = [1, 1]} : vector<54x48xf32> to vector<54x32xf32>
    %121 = vector.broadcast %119 : vector<1x32xf32> to vector<54x32xf32>
    %122 = arith.addf %120, %121 : vector<54x32xf32>
    %123 = arith.negf %122 : vector<54x32xf32>
    %124 = math.exp %123 : vector<54x32xf32>
    %cst_35 = arith.constant 1.000000e+00 : f32
    %125 = vector.broadcast %cst_35 : f32 to vector<54x32xf32>
    %126 = arith.addf %125, %124 : vector<54x32xf32>
    %127 = arith.divf %125, %126 : vector<54x32xf32>
    %128 = vector.extract_strided_slice %118 {offsets = [0, 32], sizes = [54, 16], strides = [1, 1]} : vector<54x48xf32> to vector<54x16xf32>
    %129 = arith.addf %128, %6 : vector<54x16xf32>
    %130 = vector.extract_strided_slice %127 {offsets = [0, 0], sizes = [54, 16], strides = [1, 1]} : vector<54x32xf32> to vector<54x16xf32>
    %131 = vector.extract_strided_slice %127 {offsets = [0, 16], sizes = [54, 16], strides = [1, 1]} : vector<54x32xf32> to vector<54x16xf32>
    %132 = arith.mulf %130, %101 : vector<54x16xf32>
    %133 = vector.extract_strided_slice %132 {offsets = [53, 0], sizes = [1, 16], strides = [1, 1]} : vector<54x16xf32> to vector<1x16xf32>
    %134 = vector.extract_strided_slice %132 {offsets = [0, 0], sizes = [53, 16], strides = [1, 1]} : vector<54x16xf32> to vector<53x16xf32>
    %135 = tpu.concatenate %133, %134 in 0 : vector<1x16xf32>, vector<53x16xf32> -> vector<54x16xf32>
    %136 = vector.extract_strided_slice %3 {offsets = [0, 1], sizes = [54, 1], strides = [1, 1]} : vector<54x18xf32> to vector<54x1xf32>
    %137 = vector.broadcast %136 : vector<54x1xf32> to vector<54x16xf32>
    %138 = arith.mulf %135, %137 : vector<54x16xf32>
    %139 = vector.extract_strided_slice %132 {offsets = [1, 0], sizes = [53, 16], strides = [1, 1]} : vector<54x16xf32> to vector<53x16xf32>
    %140 = vector.extract_strided_slice %132 {offsets = [0, 0], sizes = [1, 16], strides = [1, 1]} : vector<54x16xf32> to vector<1x16xf32>
    %141 = tpu.concatenate %139, %140 in 0 : vector<53x16xf32>, vector<1x16xf32> -> vector<54x16xf32>
    %142 = vector.extract_strided_slice %3 {offsets = [0, 0], sizes = [54, 1], strides = [1, 1]} : vector<54x18xf32> to vector<54x1xf32>
    %143 = vector.broadcast %142 : vector<54x1xf32> to vector<54x16xf32>
    %144 = arith.mulf %141, %143 : vector<54x16xf32>
    %145 = tpu.concatenate %138, %132, %144 in 1 : vector<54x16xf32>, vector<54x16xf32>, vector<54x16xf32> -> vector<54x48xf32>
    %146 = arith.truncf %145 : vector<54x48xf32> to vector<54x48xbf16>
    %c0_36 = arith.constant 0 : index
    %c0_37 = arith.constant 0 : index
    %147 = vector.load %arg9[%c0_36, %c0_37] : memref<48x16xbf16, #tpu.memory_space<vmem>>, vector<48x16xbf16>
    %cst_38 = arith.constant dense<0.000000e+00> : vector<54x16xf32>
    %148 = tpu.matmul %146, %147, %cst_38 {dimension_numbers = #tpu.dot_dimension_numbers<[1], [0], [0], [1], [0, 0, 1, 1], [], []>} : vector<54x48xbf16>, vector<48x16xbf16>, vector<54x16xf32> -> vector<54x16xf32>
    %149 = arith.addf %129, %148 : vector<54x16xf32>
    %cst_39 = arith.constant 1.000000e+00 : f32
    %150 = vector.broadcast %cst_39 : f32 to vector<54x16xf32>
    %151 = arith.subf %150, %131 : vector<54x16xf32>
    %152 = arith.mulf %151, %101 : vector<54x16xf32>
    %153 = arith.mulf %131, %149 : vector<54x16xf32>
    %154 = arith.addf %152, %153 : vector<54x16xf32>
    %cst_40 = arith.constant 2.000000e+01 : f32
    %155 = vector.broadcast %cst_40 : f32 to vector<54x16xf32>
    %156 = arith.minimumf %154, %155 : vector<54x16xf32>
    %157 = math.exp %156 : vector<54x16xf32>
    %cst_41 = arith.constant 2.000000e+00 : f32
    %158 = vector.broadcast %cst_41 : f32 to vector<54x16xf32>
    %159 = arith.addf %157, %158 : vector<54x16xf32>
    %160 = arith.mulf %157, %159 : vector<54x16xf32>
    %cst_42 = arith.constant 2.000000e+01 : f32
    %161 = vector.broadcast %cst_42 : f32 to vector<54x16xf32>
    %162 = arith.cmpf ogt, %154, %161 : vector<54x16xf32>
    %cst_43 = arith.constant 2.000000e+00 : f32
    %163 = vector.broadcast %cst_43 : f32 to vector<54x16xf32>
    %164 = arith.addf %160, %163 : vector<54x16xf32>
    %165 = tpu.reciprocal %164 {approx = true} : vector<54x16xf32> -> vector<54x16xf32>
    %166 = arith.mulf %160, %165 : vector<54x16xf32>
    %167 = arith.mulf %154, %166 : vector<54x16xf32>
    %168 = arith.select %162, %154, %167 : vector<54x16xi1>, vector<54x16xf32>
    %169 = arith.mulf %168, %168 : vector<54x16xf32>
    %170 = tpu.concatenate %168, %169 in 1 : vector<54x16xf32>, vector<54x16xf32> -> vector<54x32xf32>
    %cst_44 = arith.constant dense<0.000000e+00> : vector<32xf32>
    %171 = vector.multi_reduction <add>, %170, %cst_44 [0] : vector<54x32xf32> to vector<32xf32>
    %172 = vector.shape_cast %171 : vector<32xf32> to vector<1x32xf32>
    %173 = vector.extract_strided_slice %172 {offsets = [0, 0], sizes = [1, 16], strides = [1, 1]} : vector<1x32xf32> to vector<1x16xf32>
    %cst_45 = arith.constant 0.0185185187 : f32
    %174 = vector.broadcast %cst_45 : f32 to vector<1x16xf32>
    %175 = arith.mulf %173, %174 : vector<1x16xf32>
    %176 = vector.extract_strided_slice %172 {offsets = [0, 16], sizes = [1, 16], strides = [1, 1]} : vector<1x32xf32> to vector<1x16xf32>
    %cst_46 = arith.constant 0.0185185187 : f32
    %177 = vector.broadcast %cst_46 : f32 to vector<1x16xf32>
    %178 = arith.mulf %176, %177 : vector<1x16xf32>
    %179 = arith.mulf %175, %175 : vector<1x16xf32>
    %180 = arith.subf %178, %179 : vector<1x16xf32>
    %cst_47 = arith.constant 0.000000e+00 : f32
    %181 = vector.broadcast %cst_47 : f32 to vector<1x16xf32>
    %182 = arith.maximumf %180, %181 : vector<1x16xf32>
    %183 = vector.extract_strided_slice %4 {offsets = [0, 32], sizes = [1, 16], strides = [1, 1]} : vector<1x96xf32> to vector<1x16xf32>
    %184 = vector.extract_strided_slice %4 {offsets = [0, 48], sizes = [1, 16], strides = [1, 1]} : vector<1x96xf32> to vector<1x16xf32>
    %185 = vector.broadcast %175 : vector<1x16xf32> to vector<54x16xf32>
    %186 = arith.subf %168, %185 : vector<54x16xf32>
    %cst_48 = arith.constant 9.99999974E-6 : f32
    %187 = vector.broadcast %cst_48 : f32 to vector<1x16xf32>
    %188 = arith.addf %182, %187 : vector<1x16xf32>
    %189 = math.rsqrt %188 : vector<1x16xf32>
    %190 = vector.broadcast %189 : vector<1x16xf32> to vector<54x16xf32>
    %191 = arith.mulf %186, %190 : vector<54x16xf32>
    %192 = vector.broadcast %183 : vector<1x16xf32> to vector<54x16xf32>
    %193 = arith.mulf %191, %192 : vector<54x16xf32>
    %194 = vector.broadcast %184 : vector<1x16xf32> to vector<54x16xf32>
    %195 = arith.addf %193, %194 : vector<54x16xf32>
    %c0_49 = arith.constant 0 : index
    %c0_50 = arith.constant 0 : index
    %196 = vector.load %arg12[%c0_49, %c0_50] : memref<54x16xf32, #tpu.memory_space<vmem>>, vector<54x16xf32>
    tpu.vector_store %arg12[%c0_49, %c0_50], %195 {strides = array<i32>} : memref<54x16xf32, #tpu.memory_space<vmem>>, vector<54x16xf32>,
    %c2_i32 = arith.constant 2 : i32
    %197 = arith.cmpi sge, %arg0, %c2_i32 : i32
    %198 = arith.extui %197 : i1 to i32
    %c0_i32_51 = arith.constant 0 : i32
    %199 = arith.cmpi ne, %198, %c0_i32_51 : i32
    scf.if %199 {
      %200 = vector.extract_strided_slice %3 {offsets = [0, 2], sizes = [54, 16], strides = [1, 1]} : vector<54x18xf32> to vector<54x16xf32>
      %201 = arith.mulf %195, %200 : vector<54x16xf32>
      %c0_52 = arith.constant 0 : index
      %c0_53 = arith.constant 0 : index
      %202 = vector.load %arg4[%c0_52, %c0_53] : memref<2x54xf32, #tpu.memory_space<vmem>>, vector<2x54xf32>
      %cst_54 = arith.constant dense<0.000000e+00> : vector<2x16xf32>
      %203 = tpu.matmul %202, %201, %cst_54 {dimension_numbers = #tpu.dot_dimension_numbers<[1], [0], [0], [1], [0, 0, 1, 1], [], []>} : vector<2x54xf32>, vector<54x16xf32>, vector<2x16xf32> -> vector<2x16xf32>
      %cst_55 = arith.constant dense<0.000000e+00> : vector<2xf32>
      %204 = vector.multi_reduction <add>, %203, %cst_55 [1] : vector<2x16xf32> to vector<2xf32>
      %205 = vector.shape_cast %204 : vector<2xf32> to vector<2x1xf32>
      %c0_56 = arith.constant 0 : index
      %c0_57 = arith.constant 0 : index
      %c0_58 = arith.constant 0 : index
      %206 = vector.load %arg10[%c0_56, %c0_57, %c0_58] : memref<1x2x1xf32, #tpu.memory_space<vmem>>, vector<1x2x1xf32>
      %207 = vector.shape_cast %206 : vector<1x2x1xf32> to vector<2x1xf32>
      %208 = vector.shape_cast %205 : vector<2x1xf32> to vector<1x2x1xf32>
      tpu.vector_store %arg10[%c0_56, %c0_57, %c0_58], %208 {strides = array<i32>} : memref<1x2x1xf32, #tpu.memory_space<vmem>>, vector<1x2x1xf32>,
    } else {
    }
    return
  }
  func.func @transform_0(%arg0: i32) -> (i32, i32, i32) {
    %c0_i32 = arith.constant 0 : i32
    %c0_i32_0 = arith.constant 0 : i32
    %c0_i32_1 = arith.constant 0 : i32
    return %arg0, %c0_i32, %c0_i32_0 : i32, i32, i32
  }
  func.func @transform_1(%arg0: i32) -> (i32, i32, i32) {
    %c0_i32 = arith.constant 0 : i32
    %c0_i32_0 = arith.constant 0 : i32
    %c0_i32_1 = arith.constant 0 : i32
    return %arg0, %c0_i32, %c0_i32_0 : i32, i32, i32
  }
  func.func @transform_2(%arg0: i32) -> (i32, i32) {
    %c0_i32 = arith.constant 0 : i32
    %c0_i32_0 = arith.constant 0 : i32
    %c0_i32_1 = arith.constant 0 : i32
    return %c0_i32, %c0_i32_0 : i32, i32
  }
  func.func @transform_3(%arg0: i32) -> (i32, i32) {
    %c0_i32 = arith.constant 0 : i32
    %c0_i32_0 = arith.constant 0 : i32
    %c0_i32_1 = arith.constant 0 : i32
    return %c0_i32, %c0_i32_0 : i32, i32
  }
  func.func @transform_4(%arg0: i32) -> (i32, i32) {
    %c0_i32 = arith.constant 0 : i32
    %c0_i32_0 = arith.constant 0 : i32
    %c0_i32_1 = arith.constant 0 : i32
    return %c0_i32, %c0_i32_0 : i32, i32
  }
  func.func @transform_5(%arg0: i32) -> (i32, i32) {
    %c0_i32 = arith.constant 0 : i32
    %c0_i32_0 = arith.constant 0 : i32
    %c0_i32_1 = arith.constant 0 : i32
    return %c0_i32, %c0_i32_0 : i32, i32
  }
  func.func @transform_6(%arg0: i32) -> (i32, i32) {
    %c0_i32 = arith.constant 0 : i32
    %c0_i32_0 = arith.constant 0 : i32
    %c0_i32_1 = arith.constant 0 : i32
    return %c0_i32, %c0_i32_0 : i32, i32
  }
  func.func @transform_7(%arg0: i32) -> (i32, i32) {
    %c0_i32 = arith.constant 0 : i32
    %c0_i32_0 = arith.constant 0 : i32
    %c0_i32_1 = arith.constant 0 : i32
    return %c0_i32, %c0_i32_0 : i32, i32
  }
  func.func @transform_8(%arg0: i32) -> (i32, i32) {
    %c0_i32 = arith.constant 0 : i32
    %c0_i32_0 = arith.constant 0 : i32
    %c0_i32_1 = arith.constant 0 : i32
    return %c0_i32, %c0_i32_0 : i32, i32
  }
  func.func @transform_9(%arg0: i32) -> (i32, i32, i32) {
    %c2_i32 = arith.constant 2 : i32
    %0 = arith.subi %arg0, %c2_i32 : i32
    %c0_i32 = arith.constant 0 : i32
    %1 = arith.maxsi %0, %c0_i32 : i32
    %c0_i32_0 = arith.constant 0 : i32
    %c0_i32_1 = arith.constant 0 : i32
    %c0_i32_2 = arith.constant 0 : i32
    return %1, %c0_i32_0, %c0_i32_1 : i32, i32, i32
  }
}

</mosaic_0001>

<llo_original>
// kernel: tile.7
$region0: #{tile.7}
  %s0 = inlined_call_operand.vmem [shape: f32[2,27,16], index: 0, kind: input, shape index: {}]
  %s1 = inlined_call_operand.vmem [shape: f32[54,16], index: 1, kind: output, shape index: {}]
  $region1: #{tile.7} parent=0
    #allocation0 [shape = 'u8[65536]{0}', space=vmem, size = 0x10000, scoped, tag = 'scoped mem for input reshape']
    %s3 = sshllo.u32 0, 2
    %s4 = smul.addr 2, 15
    %s5 = scalar_lea.vmem %s0, %s4
    %v6 = vld [vmem:[%s5] sm:%s3]
    %s7 = scalar_lea.vmem [#allocation0], 120
    %8 = vst [vmem:[%s7] sm:%s3] %v6
    %s9 = smul.addr 2, 14
    %s10 = scalar_lea.vmem %s0, %s9
    %v11 = vld [vmem:[%s10] sm:%s3]
    %s12 = scalar_lea.vmem [#allocation0], 112
    %13 = vst [vmem:[%s12] sm:%s3] %v11
    %s14 = smul.addr 2, 13
    %s15 = scalar_lea.vmem %s0, %s14
    %v16 = vld [vmem:[%s15] sm:%s3]
    %s17 = scalar_lea.vmem [#allocation0], 104
    %18 = vst [vmem:[%s17] sm:%s3] %v16
    %s19 = smul.addr 2, 12
    %s20 = scalar_lea.vmem %s0, %s19
    %v21 = vld [vmem:[%s20] sm:%s3]
    %s22 = scalar_lea.vmem [#allocation0], 96
    %23 = vst [vmem:[%s22] sm:%s3] %v21
    %s24 = smul.addr 2, 11
    %s25 = scalar_lea.vmem %s0, %s24
    %v26 = vld [vmem:[%s25] sm:%s3]
    %s27 = scalar_lea.vmem [#allocation0], 88
    %28 = vst [vmem:[%s27] sm:%s3] %v26
    %s29 = smul.addr 2, 10
    %s30 = scalar_lea.vmem %s0, %s29
    %v31 = vld [vmem:[%s30] sm:%s3]
    %s32 = scalar_lea.vmem [#allocation0], 80
    %33 = vst [vmem:[%s32] sm:%s3] %v31
    %s34 = smul.addr 2, 9
    %s35 = scalar_lea.vmem %s0, %s34
    %v36 = vld [vmem:[%s35] sm:%s3]
    %s37 = scalar_lea.vmem [#allocation0], 72
    %38 = vst [vmem:[%s37] sm:%s3] %v36
    %s39 = smul.addr 2, 8
    %s40 = scalar_lea.vmem %s0, %s39
    %v41 = vld [vmem:[%s40] sm:%s3]
    %s42 = scalar_lea.vmem [#allocation0], 64
    %43 = vst [vmem:[%s42] sm:%s3] %v41
    %s44 = smul.addr 2, 7
    %s45 = scalar_lea.vmem %s0, %s44
    %v46 = vld [vmem:[%s45] sm:%s3]
    %s47 = scalar_lea.vmem [#allocation0], 56
    %48 = vst [vmem:[%s47] sm:%s3] %v46
    %s49 = smul.addr 2, 6
    %s50 = scalar_lea.vmem %s0, %s49
    %v51 = vld [vmem:[%s50] sm:%s3]
    %s52 = scalar_lea.vmem [#allocation0], 48
    %53 = vst [vmem:[%s52] sm:%s3] %v51
    %s54 = smul.addr 2, 5
    %s55 = scalar_lea.vmem %s0, %s54
    %v56 = vld [vmem:[%s55] sm:%s3]
    %s57 = scalar_lea.vmem [#allocation0], 40
    %58 = vst [vmem:[%s57] sm:%s3] %v56
    %s59 = smul.addr 2, 4
    %s60 = scalar_lea.vmem %s0, %s59
    %v61 = vld [vmem:[%s60] sm:%s3]
    %s62 = scalar_lea.vmem [#allocation0], 32
    %63 = vst [vmem:[%s62] sm:%s3] %v61
    %s64 = smul.addr 2, 3
    %s65 = scalar_lea.vmem %s0, %s64
    %v66 = vld [vmem:[%s65] sm:%s3]
    %s67 = scalar_lea.vmem [#allocation0], 24
    %68 = vst [vmem:[%s67] sm:%s3] %v66
    %s69 = smul.addr 2, 2
    %s70 = scalar_lea.vmem %s0, %s69
    %v71 = vld [vmem:[%s70] sm:%s3]
    %s72 = scalar_lea.vmem [#allocation0], 16
    %73 = vst [vmem:[%s72] sm:%s3] %v71
    %s74 = scalar_lea.vmem %s0, 2
    %v75 = vld [vmem:[%s74] sm:%s3]
    %s76 = scalar_lea.vmem [#allocation0], 8
    %77 = vst [vmem:[%s76] sm:%s3] %v75
    %v78 = vld [vmem:[%s0] sm:%s3]
    %79 = vst [vmem:[#allocation0] sm:%s3] %v78
    %v80 = vld [vmem:[#allocation0] ss:$8 sm:$0xf]
    %v81 = vld [vmem:[#allocation0] ss:$8 sm:$0xf0]
    %vm82 = vcmask 1047556
    %v83 = vsel %vm82, %v81, %v80
    %vm84 = vcmask 220160
    %85 = vst.msk [vmem:[%s1] sm:$0xff] %vm84, %v83
    %s86 = scalar_lea.vmem [#allocation0], 64
    %v87 = vld [vmem:[%s86] ss:$8 sm:$0xf]
    %s88 = scalar_lea.vmem [#allocation0], 64
    %v89 = vld [vmem:[%s88] ss:$8 sm:$0xf0]
    %vm90 = vcmask 1047556
    %v91 = vsel %vm90, %v89, %v87
    %vm92 = vcmask 220160
    %s93 = scalar_lea.vmem %s1, 8
    %94 = vst.msk [vmem:[%s93] sm:$0xff] %vm92, %v91
    %s95 = scalar_lea.vmem [#allocation0], 1
    %v96 = vld [vmem:[%s95] ss:$8 sm:$0xf]
    %s97 = scalar_lea.vmem [#allocation0], 1
    %v98 = vld [vmem:[%s97] ss:$8 sm:$0xf0]
    %vm99 = vcmask 1047556
    %v100 = vsel %vm99, %v98, %v96
    %101 = vrot.lane.b32.xlu0 %v100, 27
    %v102 = vpop.permute.xlu0 %101
    %vm103 = vcmask 441560
    %104 = vst.msk [vmem:[%s1] sm:$0xff] %vm103, %v102
    %s105 = scalar_lea.vmem [#allocation0], 65
    %v106 = vld [vmem:[%s105] ss:$8 sm:$0xf]
    %s107 = scalar_lea.vmem [#allocation0], 65
    %v108 = vld [vmem:[%s107] ss:$8 sm:$0xf0]
    %vm109 = vcmask 1047556
    %v110 = vsel %vm109, %v108, %v106
    %111 = vrot.lane.b32.xlu0 %v110, 27
    %v112 = vpop.permute.xlu0 %111
    %vm113 = vcmask 441560
    %s114 = scalar_lea.vmem %s1, 8
    %115 = vst.msk [vmem:[%s114] sm:$0xff] %vm113, %v112

// kernel: _lambda_.1
$region0: #{_lambda_.1}
  #allocation0 [shape = 'u32[]', space=smem, size = 0x4, offset = 0x4, fixed_abs, tag = 'smem constant byte address 0x4 - core index']
  #allocation1 [shape = 'u32[144,128]{1,0:T(1,128)}', space=vmem, size = 0x12000, scoped, tag = 'internal scratch']
  #allocation2 [shape = 'f32[54,16]{1,0:T(8,128)}', space=vmem, size = 0x7000, scoped, tag = 'scratch operand']
  #allocation3 [shape = 'f32[54,16]{1,0:T(8,128)}', space=vmem, size = 0x7000, scoped, tag = 'scratch operand']
  %s0 = inlined_call_operand.vmem [shape: f32[4,54,48], index: 0, kind: input, shape index: {}]
  %s1 = inlined_call_operand.vmem [shape: f32[4,54,16], index: 1, kind: input, shape index: {}]
  %s2 = inlined_call_operand.vmem [shape: f32[54,18], index: 2, kind: input, shape index: {}]
  %s3 = inlined_call_operand.vmem [shape: f32[2,54], index: 3, kind: input, shape index: {}]
  %s4 = inlined_call_operand.vmem [shape: f32[1,96], index: 4, kind: input, shape index: {}]
  %s5 = inlined_call_operand.vmem [shape: bf16[48,32], index: 5, kind: input, shape index: {}]
  %s6 = inlined_call_operand.vmem [shape: bf16[48,16], index: 6, kind: input, shape index: {}]
  %s7 = inlined_call_operand.vmem [shape: bf16[96,48], index: 7, kind: input, shape index: {}]
  %s8 = inlined_call_operand.vmem [shape: bf16[48,16], index: 8, kind: input, shape index: {}]
  %s9 = inlined_call_operand.vmem [shape: f32[2,2,1], index: 9, kind: output, shape index: {}]
  %s10 = sld [smem:[#allocation0]]
  $region77: #{_lambda_.1} parent=0
    _
  %s12 = ssub.s32 1, %s10
  %s13 = scalar_select 0, %s12, %s10
  loop: start=0, step=1, limit=6
  $region2: #{_lambda_.1} parent=0 // loop_pre_header
    _
  $region3: #{_lambda_.1} parent=0 // loop_header
    %s15 = sphi 0, %s19
    %p16 = scmp.ge.s32.totalorder %s15, 6
    %s25 = sphi 0, %s27
    %s28 = sphi 0, %s25
    %s29 = sphi 0, %s28
    %s45 = sphi 0, %s29
    %s51 = sphi 0, %s53
    %s54 = sphi 0, %s51
    %s55 = sphi 0, %s54
    %s71 = sphi 0, %s55
    %s75 = sphi 0, %s75
    %s77 = sphi 0, %s75
    %s78 = sphi 0, %s77
    %s92 = sphi 0, %s78
    %s96 = sphi 0, %s96
    %s98 = sphi 0, %s96
    %s99 = sphi 0, %s98
    %s113 = sphi 0, %s99
    %s117 = sphi 0, %s117
    %s119 = sphi 0, %s117
    %s120 = sphi 0, %s119
    %s134 = sphi 0, %s120
    %s138 = sphi 0, %s138
    %s140 = sphi 0, %s138
    %s141 = sphi 0, %s140
    %s155 = sphi 0, %s141
    %s159 = sphi 0, %s159
    %s161 = sphi 0, %s159
    %s162 = sphi 0, %s161
    %s176 = sphi 0, %s162
    %s180 = sphi 0, %s180
    %s182 = sphi 0, %s180
    %s183 = sphi 0, %s182
    %s197 = sphi 0, %s183
    %s201 = sphi 0, %s201
    %s203 = sphi 0, %s201
    %s204 = sphi 0, %s203
    %s218 = sphi 0, %s204
    %s230 = sphi 0, %s232
    %s233 = sphi 0, %s230
    %s234 = sphi 0, %s233
    %s250 = sphi 0, %s234
  $region4: #{_lambda_.1} parent=0 // loop_header_branch
    %18 = sbr.rel (%p16) target = $region8
  $region5: #{_lambda_.1} parent=0 // loop_body
    %s20 = ssub.s32 %s15, 1
    %s21 = ssub.s32 %s15, 2
    %s22 = sadd.s32 %s15, 1
    %s23 = ssub.s32 %s15, %s22
    %p24 = scmp.eq.s32.totalorder %s23, 0
    %s26 = sadd.s32 %s25, 1
    %s27 = scalar_select %p24, %s25, %s26
    %p30 = pneg %p24
    %p31 = scmp.eq.s32.totalorder %s15, 3
    %p32 = por %p30, %p31
    %p33 = scmp.ne.s32.totalorder %s25, %s28
    %p34 = scmp.eq.s32.totalorder %s15, 0
    %p35 = por %p33, %p34
    %p36 = scmp.ne.s32.totalorder %s25, %s28
    %p37 = scmp.eq.s32.totalorder %s20, 3
    %p38 = por %p36, %p37
    %p39 = scmp.ne.s32.totalorder %s28, %s29
    %p40 = scmp.eq.s32.totalorder %s20, 0
    %p41 = por %p39, %p40
    %p42 = scmp.ne.s32.totalorder %s28, %s29
    %p43 = scmp.eq.s32.totalorder %s21, 3
    %p44 = por %p42, %p43
    %p46 = scmp.ne.s32.totalorder %s29, %s45
    %p47 = scmp.eq.s32.totalorder %s21, 0
    %p48 = por %p46, %p47
    %s49 = ssub.s32 %s15, %s22
    %p50 = scmp.eq.s32.totalorder %s49, 0
    %s52 = sadd.s32 %s51, 1
    %s53 = scalar_select %p50, %s51, %s52
    %p56 = pneg %p50
    %p57 = scmp.eq.s32.totalorder %s15, 3
    %p58 = por %p56, %p57
    %p59 = scmp.ne.s32.totalorder %s51, %s54
    %p60 = scmp.eq.s32.totalorder %s15, 0
    %p61 = por %p59, %p60
    %p62 = scmp.ne.s32.totalorder %s51, %s54
    %p63 = scmp.eq.s32.totalorder %s20, 3
    %p64 = por %p62, %p63
    %p65 = scmp.ne.s32.totalorder %s54, %s55
    %p66 = scmp.eq.s32.totalorder %s20, 0
    %p67 = por %p65, %p66
    %p68 = scmp.ne.s32.totalorder %s54, %s55
    %p69 = scmp.eq.s32.totalorder %s21, 3
    %p70 = por %p68, %p69
    %p72 = scmp.ne.s32.totalorder %s55, %s71
    %p73 = scmp.eq.s32.totalorder %s21, 0
    %p74 = por %p72, %p73
    %s76 = sadd.s32 %s75, 1
    %p79 = scmp.eq.s32.totalorder %s15, 3
    %p80 = scmp.ne.s32.totalorder %s75, %s77
    %p81 = scmp.eq.s32.totalorder %s15, 0
    %p82 = por %p80, %p81
    %p83 = scmp.ne.s32.totalorder %s75, %s77
    %p84 = scmp.eq.s32.totalorder %s20, 3
    %p85 = por %p83, %p84
    %p86 = scmp.ne.s32.totalorder %s77, %s78
    %p87 = scmp.eq.s32.totalorder %s20, 0
    %p88 = por %p86, %p87
    %p89 = scmp.ne.s32.totalorder %s77, %s78
    %p90 = scmp.eq.s32.totalorder %s21, 3
    %p91 = por %p89, %p90
    %p93 = scmp.ne.s32.totalorder %s78, %s92
    %p94 = scmp.eq.s32.totalorder %s21, 0
    %p95 = por %p93, %p94
    %s97 = sadd.s32 %s96, 1
    %p100 = scmp.eq.s32.totalorder %s15, 3
    %p101 = scmp.ne.s32.totalorder %s96, %s98
    %p102 = scmp.eq.s32.totalorder %s15, 0
    %p103 = por %p101, %p102
    %p104 = scmp.ne.s32.totalorder %s96, %s98
    %p105 = scmp.eq.s32.totalorder %s20, 3
    %p106 = por %p104, %p105
    %p107 = scmp.ne.s32.totalorder %s98, %s99
    %p108 = scmp.eq.s32.totalorder %s20, 0
    %p109 = por %p107, %p108
    %p110 = scmp.ne.s32.totalorder %s98, %s99
    %p111 = scmp.eq.s32.totalorder %s21, 3
    %p112 = por %p110, %p111
    %p114 = scmp.ne.s32.totalorder %s99, %s113
    %p115 = scmp.eq.s32.totalorder %s21, 0
    %p116 = por %p114, %p115
    %s118 = sadd.s32 %s117, 1
    %p121 = scmp.eq.s32.totalorder %s15, 3
    %p122 = scmp.ne.s32.totalorder %s117, %s119
    %p123 = scmp.eq.s32.totalorder %s15, 0
    %p124 = por %p122, %p123
    %p125 = scmp.ne.s32.totalorder %s117, %s119
    %p126 = scmp.eq.s32.totalorder %s20, 3
    %p127 = por %p125, %p126
    %p128 = scmp.ne.s32.totalorder %s119, %s120
    %p129 = scmp.eq.s32.totalorder %s20, 0
    %p130 = por %p128, %p129
    %p131 = scmp.ne.s32.totalorder %s119, %s120
    %p132 = scmp.eq.s32.totalorder %s21, 3
    %p133 = por %p131, %p132
    %p135 = scmp.ne.s32.totalorder %s120, %s134
    %p136 = scmp.eq.s32.totalorder %s21, 0
    %p137 = por %p135, %p136
    %s139 = sadd.s32 %s138, 1
    %p142 = scmp.eq.s32.totalorder %s15, 3
    %p143 = scmp.ne.s32.totalorder %s138, %s140
    %p144 = scmp.eq.s32.totalorder %s15, 0
    %p145 = por %p143, %p144
    %p146 = scmp.ne.s32.totalorder %s138, %s140
    %p147 = scmp.eq.s32.totalorder %s20, 3
    %p148 = por %p146, %p147
    %p149 = scmp.ne.s32.totalorder %s140, %s141
    %p150 = scmp.eq.s32.totalorder %s20, 0
    %p151 = por %p149, %p150
    %p152 = scmp.ne.s32.totalorder %s140, %s141
    %p153 = scmp.eq.s32.totalorder %s21, 3
    %p154 = por %p152, %p153
    %p156 = scmp.ne.s32.totalorder %s141, %s155
    %p157 = scmp.eq.s32.totalorder %s21, 0
    %p158 = por %p156, %p157
    %s160 = sadd.s32 %s159, 1
    %p163 = scmp.eq.s32.totalorder %s15, 3
    %p164 = scmp.ne.s32.totalorder %s159, %s161
    %p165 = scmp.eq.s32.totalorder %s15, 0
    %p166 = por %p164, %p165
    %p167 = scmp.ne.s32.totalorder %s159, %s161
    %p168 = scmp.eq.s32.totalorder %s20, 3
    %p169 = por %p167, %p168
    %p170 = scmp.ne.s32.totalorder %s161, %s162
    %p171 = scmp.eq.s32.totalorder %s20, 0
    %p172 = por %p170, %p171
    %p173 = scmp.ne.s32.totalorder %s161, %s162
    %p174 = scmp.eq.s32.totalorder %s21, 3
    %p175 = por %p173, %p174
    %p177 = scmp.ne.s32.totalorder %s162, %s176
    %p178 = scmp.eq.s32.totalorder %s21, 0
    %p179 = por %p177, %p178
    %s181 = sadd.s32 %s180, 1
    %p184 = scmp.eq.s32.totalorder %s15, 3
    %p185 = scmp.ne.s32.totalorder %s180, %s182
    %p186 = scmp.eq.s32.totalorder %s15, 0
    %p187 = por %p185, %p186
    %p188 = scmp.ne.s32.totalorder %s180, %s182
    %p189 = scmp.eq.s32.totalorder %s20, 3
    %p190 = por %p188, %p189
    %p191 = scmp.ne.s32.totalorder %s182, %s183
    %p192 = scmp.eq.s32.totalorder %s20, 0
    %p193 = por %p191, %p192
    %p194 = scmp.ne.s32.totalorder %s182, %s183
    %p195 = scmp.eq.s32.totalorder %s21, 3
    %p196 = por %p194, %p195
    %p198 = scmp.ne.s32.totalorder %s183, %s197
    %p199 = scmp.eq.s32.totalorder %s21, 0
    %p200 = por %p198, %p199
    %s202 = sadd.s32 %s201, 1
    %p205 = scmp.eq.s32.totalorder %s15, 3
    %p206 = scmp.ne.s32.totalorder %s201, %s203
    %p207 = scmp.eq.s32.totalorder %s15, 0
    %p208 = por %p206, %p207
    %p209 = scmp.ne.s32.totalorder %s201, %s203
    %p210 = scmp.eq.s32.totalorder %s20, 3
    %p211 = por %p209, %p210
    %p212 = scmp.ne.s32.totalorder %s203, %s204
    %p213 = scmp.eq.s32.totalorder %s20, 0
    %p214 = por %p212, %p213
    %p215 = scmp.ne.s32.totalorder %s203, %s204
    %p216 = scmp.eq.s32.totalorder %s21, 3
    %p217 = por %p215, %p216
    %p219 = scmp.ne.s32.totalorder %s204, %s218
    %p220 = scmp.eq.s32.totalorder %s21, 0
    %p221 = por %p219, %p220
    %s222 = ssub.s32 %s15, 2
    %p223 = scmp.gt.s32.totalorder %s222, 0
    %s224 = scalar_select %p223, %s222, 0
    %s225 = ssub.s32 %s22, 2
    %p226 = scmp.gt.s32.totalorder %s225, 0
    %s227 = scalar_select %p226, %s225, 0
    %s228 = ssub.s32 %s224, %s227
    %p229 = scmp.eq.s32.totalorder %s228, 0
    %s231 = sadd.s32 %s230, 1
    %s232 = scalar_select %p229, %s230, %s231
    %p235 = pneg %p229
    %p236 = scmp.eq.s32.totalorder %s15, 3
    %p237 = por %p235, %p236
    %p238 = scmp.ne.s32.totalorder %s230, %s233
    %p239 = scmp.eq.s32.totalorder %s15, 0
    %p240 = por %p238, %p239
    %p241 = scmp.ne.s32.totalorder %s230, %s233
    %p242 = scmp.eq.s32.totalorder %s20, 3
    %p243 = por %p241, %p242
    %p244 = scmp.ne.s32.totalorder %s233, %s234
    %p245 = scmp.eq.s32.totalorder %s20, 0
    %p246 = por %p244, %p245
    %p247 = scmp.ne.s32.totalorder %s233, %s234
    %p248 = scmp.eq.s32.totalorder %s21, 3
    %p249 = por %p247, %p248
    %p251 = scmp.ne.s32.totalorder %s234, %s250
    %p252 = scmp.eq.s32.totalorder %s21, 0
    %p253 = por %p251, %p252
    %p254 = scmp.le.s32.totalorder 1, %s15
    %p255 = scmp.lt.s32.totalorder %s15, 5
    %p256 = pnand %p254, %p255
    %p257 = pneg %p256
    // Predicated region
    $region9: #{_lambda_.1} parent=5 // pred_check
      _
    $region10: #{_lambda_.1} parent=5 // pred_check_branch
      %259 = sbr.rel (%p256) target = $region12
    $region11: #{_lambda_.1} parent=5 // pred_region
      %s260 = ssub.s32 %s15, 1
      // Predicated region
      $region13: #{_lambda_.1} parent=11 // pred_check
        %p261 = pneg %p88
      $region14: #{_lambda_.1} parent=11 // pred_check_branch
        %263 = sbr.rel (%p261) target = $region16
      $region15: #{_lambda_.1} parent=11 // pred_region
        _
      $region16: #{_lambda_.1} parent=11 // pred_fallthru
        _
      // Predicated region
      $region17: #{_lambda_.1} parent=11 // pred_check
        %p264 = pneg %p109
      $region18: #{_lambda_.1} parent=11 // pred_check_branch
        %266 = sbr.rel (%p264) target = $region20
      $region19: #{_lambda_.1} parent=11 // pred_region
        _
      $region20: #{_lambda_.1} parent=11 // pred_fallthru
        _
      // Predicated region
      $region21: #{_lambda_.1} parent=11 // pred_check
        %p267 = pneg %p130
      $region22: #{_lambda_.1} parent=11 // pred_check_branch
        %269 = sbr.rel (%p267) target = $region24
      $region23: #{_lambda_.1} parent=11 // pred_region
        _
      $region24: #{_lambda_.1} parent=11 // pred_fallthru
        _
      // Predicated region
      $region25: #{_lambda_.1} parent=11 // pred_check
        %p270 = pneg %p151
      $region26: #{_lambda_.1} parent=11 // pred_check_branch
        %272 = sbr.rel (%p270) target = $region28
      $region27: #{_lambda_.1} parent=11 // pred_region
        _
      $region28: #{_lambda_.1} parent=11 // pred_fallthru
        _
      // Predicated region
      $region29: #{_lambda_.1} parent=11 // pred_check
        %p273 = pneg %p172
      $region30: #{_lambda_.1} parent=11 // pred_check_branch
        %275 = sbr.rel (%p273) target = $region32
      $region31: #{_lambda_.1} parent=11 // pred_region
        _
      $region32: #{_lambda_.1} parent=11 // pred_fallthru
        _
      // Predicated region
      $region33: #{_lambda_.1} parent=11 // pred_check
        %p276 = pneg %p193
      $region34: #{_lambda_.1} parent=11 // pred_check_branch
        %278 = sbr.rel (%p276) target = $region36
      $region35: #{_lambda_.1} parent=11 // pred_region
        _
      $region36: #{_lambda_.1} parent=11 // pred_fallthru
        _
      // Predicated region
      $region37: #{_lambda_.1} parent=11 // pred_check
        %p279 = pneg %p214
      $region38: #{_lambda_.1} parent=11 // pred_check_branch
        %281 = sbr.rel (%p279) target = $region40
      $region39: #{_lambda_.1} parent=11 // pred_region
        _
      $region40: #{_lambda_.1} parent=11 // pred_fallthru
        _
    $region12: #{_lambda_.1} parent=5 // pred_fallthru
      _
    %p282 = scmp.lt.s32.totalorder %s15, 4
    // Predicated region
    $region41: #{_lambda_.1} parent=5 // pred_check
      %p283 = pneg %p282
    $region42: #{_lambda_.1} parent=5 // pred_check_branch
      %285 = sbr.rel (%p283) target = $region44
    $region43: #{_lambda_.1} parent=5 // pred_region
      // Predicated region
      $region45: #{_lambda_.1} parent=43 // pred_check
        %p286 = pneg %p35
      $region46: #{_lambda_.1} parent=43 // pred_check_branch
        %288 = sbr.rel (%p286) target = $region48
      $region47: #{_lambda_.1} parent=43 // pred_region
        %p289 = scmp.lt.s32.totalorder %s15, 3
        %s290 = scalar_select %p289, %s15, 3
        %s291 = smul.addr %s290, 7
        %s292 = smul.addr %s291, 8
        %s293 = scalar_lea.vmem %s0, %s292
      $region48: #{_lambda_.1} parent=43 // pred_fallthru
        _
      // Predicated region
      $region49: #{_lambda_.1} parent=43 // pred_check
        %p294 = pneg %p61
      $region50: #{_lambda_.1} parent=43 // pred_check_branch
        %296 = sbr.rel (%p294) target = $region52
      $region51: #{_lambda_.1} parent=43 // pred_region
        %p297 = scmp.lt.s32.totalorder %s15, 3
        %s298 = scalar_select %p297, %s15, 3
        %s299 = smul.addr %s298, 7
        %s300 = smul.addr %s299, 8
        %s301 = scalar_lea.vmem %s1, %s300
      $region52: #{_lambda_.1} parent=43 // pred_fallthru
        _
    $region44: #{_lambda_.1} parent=5 // pred_fallthru
      _
    %p302 = scmp.le.s32.totalorder 1, %s15
    %p303 = scmp.lt.s32.totalorder %s15, 5
    %p304 = pnand %p302, %p303
    %p305 = pneg %p304
    // Predicated region
    $region53: #{_lambda_.1} parent=5 // pred_check
      _
    $region54: #{_lambda_.1} parent=5 // pred_check_branch
      %307 = sbr.rel (%p304) target = $region56
    $region55: #{_lambda_.1} parent=5 // pred_region
      %s308 = ssub.s32 %s15, 1
      %p309 = scmp.lt.s32.totalorder %s20, 3
      %s310 = scalar_select %p309, %s20, 3
      %s311 = smul.addr %s310, 7
      %s312 = smul.addr %s311, 8
      %s313 = scalar_lea.vmem %s0, %s312
      %p314 = pneg %p41
      %p315 = pneg %p38
      %p316 = scmp.lt.s32.totalorder %s20, 3
      %s317 = scalar_select %p316, %s20, 3
      %s318 = smul.addr %s317, 7
      %s319 = smul.addr %s318, 8
      %s320 = scalar_lea.vmem %s1, %s319
      %p321 = pneg %p67
      %p322 = pneg %p64
      %p323 = pneg %p88
      %p324 = pneg %p85
      %p325 = pneg %p109
      %p326 = pneg %p106
      %p327 = pneg %p130
      %p328 = pneg %p127
      %p329 = pneg %p151
      %p330 = pneg %p148
      %p331 = pneg %p172
      %p332 = pneg %p169
      %p333 = pneg %p193
      %p334 = pneg %p190
      %p335 = pneg %p214
      %p336 = pneg %p211
      %p337 = pneg %p246
      %p338 = pneg %p243
      %s339 = ssub.s32 %s20, 2
      %p340 = scmp.gt.s32.totalorder %s339, 0
      %s341 = scalar_select %p340, %s339, 0
      %p342 = scmp.lt.s32.totalorder %s341, 1
      %s343 = scalar_select %p342, %s341, 1
      %s344 = smul.addr %s343, 2
      %s345 = scalar_lea.vmem %s9, %s344
      %p346 = scmp.lt.s32.totalorder %s20, 3
      %s347 = scalar_select %p346, %s20, 3
      %s348 = smul.addr %s347, 7
      %s349 = smul.addr %s348, 8
      %s350 = scalar_lea.vmem %s0, %s349
      %p351 = scmp.lt.s32.totalorder %s20, 3
      %s352 = scalar_select %p351, %s20, 3
      %s353 = smul.addr %s352, 7
      %s354 = smul.addr %s353, 8
      %s355 = scalar_lea.vmem %s1, %s354
      %s356 = ssub.s32 %s20, 2
      %p357 = scmp.gt.s32.totalorder %s356, 0
      %s358 = scalar_select %p357, %s356, 0
      %p359 = scmp.lt.s32.totalorder %s358, 1
      %s360 = scalar_select %p359, %s358, 1
      %s361 = smul.addr %s360, 2
      %s362 = scalar_lea.vmem %s9, %s361
      %s363 = ssub.s32 %s20, 2
      %p364 = scmp.gt.s32.totalorder %s363, 0
      %s365 = scalar_select %p364, %s363, 0
      %p367 = scmp.eq.s32.totalorder %s20, 0
      // Predicated region
      $region57: #{_lambda_.1} parent=55 // pred_check
        %p368 = pneg %p367
      $region58: #{_lambda_.1} parent=55 // pred_check_branch
        %370 = sbr.rel (%p368) target = $region60
      $region59: #{_lambda_.1} parent=55 // pred_region
        %vm371 = vcmask 130048
        %372 = vst.msk [vmem:[#allocation2] sm:$0xff] %vm371, 0.0
        %373 = vst.msk [vmem:[#allocation2 + $0x8] sm:$0xff] %vm371, 0.0
        %374 = vst.msk [vmem:[#allocation2 + $0x10] sm:$0xff] %vm371, 0.0
        %375 = vst.msk [vmem:[#allocation2 + $0x18] sm:$0xff] %vm371, 0.0
        %376 = vst.msk [vmem:[#allocation2 + $0x20] sm:$0xff] %vm371, 0.0
        %377 = vst.msk [vmem:[#allocation2 + $0x28] sm:$0xff] %vm371, 0.0
        %vm378 = vcmask 128000
        %379 = vst.msk [vmem:[#allocation2 + $0x30] sm:$0x3f] %vm378, 0.0
        %380 = vst.msk [vmem:[#allocation3] sm:$0xff] %vm371, 0.0
        %381 = vst.msk [vmem:[#allocation3 + $0x8] sm:$0xff] %vm371, 0.0
        %382 = vst.msk [vmem:[#allocation3 + $0x10] sm:$0xff] %vm371, 0.0
        %383 = vst.msk [vmem:[#allocation3 + $0x18] sm:$0xff] %vm371, 0.0
        %384 = vst.msk [vmem:[#allocation3 + $0x20] sm:$0xff] %vm371, 0.0
        %385 = vst.msk [vmem:[#allocation3 + $0x28] sm:$0xff] %vm371, 0.0
        %386 = vst.msk [vmem:[#allocation3 + $0x30] sm:$0x3f] %vm378, 0.0
      $region60: #{_lambda_.1} parent=55 // pred_fallthru
        _
      %v387 = vld [vmem:[%s2] sm:$0xff]
      %v388 = vld [vmem:[%s2 + $0x8] sm:$0xff]
      %v389 = vld [vmem:[%s2 + $0x10] sm:$0xff]
      %v390 = vld [vmem:[%s2 + $0x18] sm:$0xff]
      %v391 = vld [vmem:[%s2 + $0x20] sm:$0xff]
      %v392 = vld [vmem:[%s2 + $0x28] sm:$0xff]
      %v393 = vld [vmem:[%s2 + $0x30] sm:$0x3f]
      %v394 = vld [vmem:[%s4] sm:$0x1]
      %v395 = vld [vmem:[%s355] sm:$0xff]
      %v396 = vld [vmem:[%s355 + $0x8] sm:$0xff]
      %v397 = vld [vmem:[%s355 + $0x10] sm:$0xff]
      %v398 = vld [vmem:[%s355 + $0x18] sm:$0xff]
      %v399 = vld [vmem:[%s355 + $0x20] sm:$0xff]
      %v400 = vld [vmem:[%s355 + $0x28] sm:$0xff]
      %v401 = vld [vmem:[%s355 + $0x30] sm:$0x3f]
      %v402 = vld [vmem:[#allocation2] sm:$0xff]
      %v403 = vld [vmem:[#allocation2 + $0x8] sm:$0xff]
      %v404 = vld [vmem:[#allocation2 + $0x10] sm:$0xff]
      %v405 = vld [vmem:[#allocation2 + $0x18] sm:$0xff]
      %v406 = vld [vmem:[#allocation2 + $0x20] sm:$0xff]
      %v407 = vld [vmem:[#allocation2 + $0x28] sm:$0xff]
      %v408 = vld [vmem:[#allocation2 + $0x30] sm:$0x3f]
      %v409 = vld [vmem:[%s350] sm:$0xff]
      %v410 = vld [vmem:[%s350 + $0x8] sm:$0xff]
      %v411 = vld [vmem:[%s350 + $0x10] sm:$0xff]
      %v412 = vld [vmem:[%s350 + $0x18] sm:$0xff]
      %v413 = vld [vmem:[%s350 + $0x20] sm:$0xff]
      %v414 = vld [vmem:[%s350 + $0x28] sm:$0xff]
      %v415 = vld [vmem:[%s350 + $0x30] sm:$0x3f]
      %v417 = vrot.slane %v408, 5
      %vm425 = vcmask 1040384
      %v426 = vrot.slane %v402, 7
      %v427 = vrot.slane %v403, 7
      %v428 = vsel %vm425, %v426, %v427
      %v429 = vrot.slane %v404, 7
      %v430 = vsel %vm425, %v427, %v429
      %v431 = vrot.slane %v405, 7
      %v432 = vsel %vm425, %v429, %v431
      %v433 = vrot.slane %v406, 7
      %v434 = vsel %vm425, %v431, %v433
      %v435 = vrot.slane %v407, 7
      %v436 = vsel %vm425, %v433, %v435
      %v437 = vrot.slane %v408, 7
      %v438 = vsel %vm425, %v435, %v437
      %v446 = vsel %vm425, %v417, %v426
      %448 = vset.pattern.permute.xlu0 1
      %449 = vperm.xlu0 %448, %v387
      %v450 = vpop.permute.xlu0 %449
      %453 = vset.pattern.permute.xlu0 1
      %454 = vperm.xlu0 %453, %v388
      %v455 = vpop.permute.xlu0 %454
      %458 = vset.pattern.permute.xlu0 1
      %459 = vperm.xlu0 %458, %v389
      %v460 = vpop.permute.xlu0 %459
      %463 = vset.pattern.permute.xlu0 1
      %464 = vperm.xlu0 %463, %v390
      %v465 = vpop.permute.xlu0 %464
      %468 = vset.pattern.permute.xlu0 1
      %469 = vperm.xlu0 %468, %v391
      %v470 = vpop.permute.xlu0 %469
      %473 = vset.pattern.permute.xlu0 1
      %474 = vperm.xlu0 %473, %v392
      %v475 = vpop.permute.xlu0 %474
      %478 = vset.pattern.permute.xlu0 1
      %479 = vperm.xlu0 %478, %v393
      %v480 = vpop.permute.xlu0 %479
      %v482 = vmul.f32 %v446, %v450
      %v483 = vmul.f32 %v428, %v455
      %v484 = vmul.f32 %v430, %v460
      %v485 = vmul.f32 %v432, %v465
      %v486 = vmul.f32 %v434, %v470
      %v487 = vmul.f32 %v436, %v475
      %v488 = vmul.f32 %v438, %v480
      %vm489 = vcmask 1046528
      %v490 = vrot.slane %v402, 1
      %v491 = vrot.slane %v403, 1
      %v492 = vsel %vm489, %v490, %v491
      %v493 = vrot.slane %v404, 1
      %v494 = vsel %vm489, %v491, %v493
      %v495 = vrot.slane %v405, 1
      %v496 = vsel %vm489, %v493, %v495
      %v497 = vrot.slane %v406, 1
      %v498 = vsel %vm489, %v495, %v497
      %v499 = vrot.slane %v407, 1
      %v500 = vsel %vm489, %v497, %v499
      %v501 = vrot.slane %v408, 1
      %v502 = vsel %vm489, %v499, %v501
      %v510 = vrot.slane %v402, 3
      %vm512 = vcmask 1044480
      %v513 = vsel %vm512, %v501, %v510
      %514 = vset.pattern.permute.xlu0 0
      %515 = vperm.xlu0 %514, %v387
      %v516 = vpop.permute.xlu0 %515
      %518 = vset.pattern.permute.xlu0 0
      %519 = vperm.xlu0 %518, %v388
      %v520 = vpop.permute.xlu0 %519
      %522 = vset.pattern.permute.xlu0 0
      %523 = vperm.xlu0 %522, %v389
      %v524 = vpop.permute.xlu0 %523
      %526 = vset.pattern.permute.xlu0 0
      %527 = vperm.xlu0 %526, %v390
      %v528 = vpop.permute.xlu0 %527
      %530 = vset.pattern.permute.xlu0 0
      %531 = vperm.xlu0 %530, %v391
      %v532 = vpop.permute.xlu0 %531
      %534 = vset.pattern.permute.xlu0 0
      %535 = vperm.xlu0 %534, %v392
      %v536 = vpop.permute.xlu0 %535
      %538 = vset.pattern.permute.xlu0 0
      %539 = vperm.xlu0 %538, %v393
      %v540 = vpop.permute.xlu0 %539
      %v542 = vmul.f32 %v492, %v516
      %v543 = vmul.f32 %v494, %v520
      %v544 = vmul.f32 %v496, %v524
      %v545 = vmul.f32 %v498, %v528
      %v546 = vmul.f32 %v500, %v532
      %v547 = vmul.f32 %v502, %v536
      %v548 = vmul.f32 %v513, %v540
      %549 = vrot.lane.b32.xlu0 %v402, 16
      %v550 = vpop.permute.xlu0 %549
      %551 = vrot.lane.b32.xlu0 %v403, 16
      %v552 = vpop.permute.xlu0 %551
      %553 = vrot.lane.b32.xlu0 %v404, 16
      %v554 = vpop.permute.xlu0 %553
      %555 = vrot.lane.b32.xlu0 %v405, 16
      %v556 = vpop.permute.xlu0 %555
      %557 = vrot.lane.b32.xlu0 %v406, 16
      %v558 = vpop.permute.xlu0 %557
      %559 = vrot.lane.b32.xlu0 %v407, 16
      %v560 = vpop.permute.xlu0 %559
      %561 = vrot.lane.b32.xlu0 %v408, 16
      %v562 = vpop.permute.xlu0 %561
      %577 = vrot.lane.b32.xlu0 %v542, 32
      %v578 = vpop.permute.xlu0 %577
      %579 = vrot.lane.b32.xlu0 %v543, 32
      %v580 = vpop.permute.xlu0 %579
      %581 = vrot.lane.b32.xlu0 %v544, 32
      %v582 = vpop.permute.xlu0 %581
      %583 = vrot.lane.b32.xlu0 %v545, 32
      %v584 = vpop.permute.xlu0 %583
      %585 = vrot.lane.b32.xlu0 %v546, 32
      %v586 = vpop.permute.xlu0 %585
      %587 = vrot.lane.b32.xlu0 %v547, 32
      %v588 = vpop.permute.xlu0 %587
      %589 = vrot.lane.b32.xlu0 %v548, 32
      %v590 = vpop.permute.xlu0 %589
      %vm598 = vcmask 130048
      %v599 = vsel %vm598, %v482, %v550
      %v600 = vsel %vm598, %v483, %v552
      %v601 = vsel %vm598, %v484, %v554
      %v602 = vsel %vm598, %v485, %v556
      %v603 = vsel %vm598, %v486, %v558
      %v604 = vsel %vm598, %v487, %v560
      %v605 = vsel %vm598, %v488, %v562
      %vm606 = vcmask 261120
      %v607 = vsel %vm606, %v599, %v578
      %v608 = vsel %vm606, %v600, %v580
      %v609 = vsel %vm606, %v601, %v582
      %v610 = vsel %vm606, %v602, %v584
      %v611 = vsel %vm606, %v603, %v586
      %v612 = vsel %vm606, %v604, %v588
      %v613 = vsel %vm606, %v605, %v590
      %v614 = vpack.c.bf16 %v608, %v607
      %v615 = vpack.c.bf16 %v610, %v609
      %v616 = vpack.c.bf16 %v612, %v611
      %v617 = vpack.c.bf16 %v613, %v613
      %v618 = vld [vmem:[%s5] sm:$0xf]
      %v619 = vld [vmem:[%s5 + $0x4] sm:$0xf]
      %v620 = vld [vmem:[%s5 + $0x8] sm:$0xf]
      %v621 = vld [vmem:[%s5 + $0xc] sm:$0xf]
      %v622 = vld [vmem:[%s5 + $0x10] sm:$0xf]
      %v623 = vld [vmem:[%s5 + $0x14] sm:$0xf]
      %v630 = vunpack.c.l.b16 %v618
      %v631 = vunpack.c.l.b16 %v619
      %v632 = vunpack.c.l.b16 %v620
      %v633 = vunpack.c.l.b16 %v621
      %v634 = vunpack.c.l.b16 %v622
      %v635 = vunpack.c.l.b16 %v623
      %v636 = vpack.c.b16 %v631, %v630
      %v637 = vpack.c.b16 %v633, %v632
      %v638 = vpack.c.b16 %v635, %v634
      %vm642 = vcmask 392192
      %v644 = vsel %vm642, %v614, 0
      %v647 = vsel %vm642, %v615, 0
      %v650 = vsel %vm642, %v616, 0
      %v653 = vsel %vm642, %v617, 0
      %655 = vmatprep.subr.bf16.mxu0 0
      %656 = vmatpush1.bf16.msra.mxu0 %v636
      %657 = vmatprep.subr.bf16.mxu0 0
      %658 = vmatpush1.bf16.msra.mxu0 %v637
      %659 = vmatprep.subr.bf16.mxu0 0
      %660 = vmatpush1.bf16.msra.mxu0 %v638
      %661 = vmatprep.subr.bf16.mxu0 0
      %662 = vmatpush1.bf16.msra.mxu0 0
      %663 = vmatprep.subr.bf16.mxu0 0
      %664 = vmatpush1.bf16.msra.mxu0 0
      %665 = vmatprep.subr.bf16.mxu0 0
      %666 = vmatpush1.bf16.msra.mxu0 0
      %667 = vmatprep.subr.bf16.mxu0 0
      %668 = vmatpush1.bf16.msra.mxu0 0
      %669 = vmatprep.subr.bf16.mxu0 0
      %670 = vmatpush1.bf16.msra.mxu0 0
      %671 = vmatprep.subr.bf16.mxu0 0
      %672 = vmatpush1.bf16.msra.mxu0 0
      %673 = vmatprep.subr.bf16.mxu0 0
      %674 = vmatpush1.bf16.msra.mxu0 0
      %675 = vmatprep.subr.bf16.mxu0 0
      %676 = vmatpush1.bf16.msra.mxu0 0
      %677 = vmatprep.subr.bf16.mxu0 0
      %678 = vmatpush1.bf16.msra.mxu0 0
      %679 = vmatprep.subr.bf16.mxu0 0
      %680 = vmatpush1.bf16.msra.mxu0 0
      %681 = vmatprep.subr.bf16.mxu0 0
      %682 = vmatpush1.bf16.msra.mxu0 0
      %683 = vmatprep.subr.bf16.mxu0 0
      %684 = vmatpush1.bf16.msra.mxu0 0
      %685 = vmatprep.subr.bf16.mxu0 0
      %686 = vmatpush1.bf16.msra.mxu0 0
      %687 = vmatprep.mubr.bf16.mxu0 0
      %688 = vmatmul.mubr.bf16.gmra.mrb[0].mxu0 %v644
      %v689 = vpop.f32.mrb[0].mxu0
      %v690 = vadd.f32 0.0, %v689
      %v691 = vpop.f32.mrb[0].mxu0
      %v692 = vpop.f32.mrb[0].mxu0
      %v693 = vadd.f32 0.0, %v692
      %v694 = vpop.f32.mrb[0].mxu0
      %695 = vmatprep.mubr.bf16.mxu0 0
      %696 = vmatmul.mubr.bf16.gmra.mrb[0].mxu0 %v647
      %v697 = vpop.f32.mrb[0].mxu0
      %v698 = vadd.f32 0.0, %v697
      %v699 = vpop.f32.mrb[0].mxu0
      %v700 = vpop.f32.mrb[0].mxu0
      %v701 = vadd.f32 0.0, %v700
      %v702 = vpop.f32.mrb[0].mxu0
      %703 = vmatprep.mubr.bf16.mxu0 0
      %704 = vmatmul.mubr.bf16.gmra.mrb[0].mxu0 %v650
      %v705 = vpop.f32.mrb[0].mxu0
      %v706 = vadd.f32 0.0, %v705
      %v707 = vpop.f32.mrb[0].mxu0
      %v708 = vpop.f32.mrb[0].mxu0
      %v709 = vadd.f32 0.0, %v708
      %v710 = vpop.f32.mrb[0].mxu0
      %711 = vmatprep.mubr.bf16.mxu0 0
      %712 = vmatmul.mubr.bf16.gmra.mrb[0].mxu0 %v653
      %v713 = vpop.f32.mrb[0].mxu0
      %v714 = vadd.f32 0.0, %v713
      %v715 = vpop.f32.mrb[0].mxu0
      %v716 = vpop.f32.mrb[0].mxu0
      %v717 = vpop.f32.mrb[0].mxu0
      %718 = vdwg.mxu0
      %v719 = vadd.f32 %v409, %v690
      %v720 = vadd.f32 %v410, %v693
      %v721 = vadd.f32 %v411, %v698
      %v722 = vadd.f32 %v412, %v701
      %v723 = vadd.f32 %v413, %v706
      %v724 = vadd.f32 %v414, %v709
      %v725 = vadd.f32 %v415, %v714
      %v726 = vxor.u32 %v719, 2147483648
      %v727 = vxor.u32 %v720, 2147483648
      %v728 = vxor.u32 %v721, 2147483648
      %v729 = vxor.u32 %v722, 2147483648
      %v730 = vxor.u32 %v723, 2147483648
      %v731 = vxor.u32 %v724, 2147483648
      %v732 = vxor.u32 %v725, 2147483648
      %v733 = vmul.f32 %v726, 1.442695
      %v734 = vpow.pop %v733
      %v735 = vmul.f32 %v727, 1.442695
      %v736 = vpow.pop %v735
      %v737 = vmul.f32 %v728, 1.442695
      %v738 = vpow.pop %v737
      %v739 = vmul.f32 %v729, 1.442695
      %v740 = vpow.pop %v739
      %v741 = vmul.f32 %v730, 1.442695
      %v742 = vpow.pop %v741
      %v743 = vmul.f32 %v731, 1.442695
      %v744 = vpow.pop %v743
      %v745 = vmul.f32 %v732, 1.442695
      %v746 = vpow.pop %v745
      %v747 = vadd.f32 %v734, 1.0
      %v748 = vadd.f32 %v736, 1.0
      %v749 = vadd.f32 %v738, 1.0
      %v750 = vadd.f32 %v740, 1.0
      %v751 = vadd.f32 %v742, 1.0
      %v752 = vadd.f32 %v744, 1.0
      %v753 = vadd.f32 %v746, 1.0
      %v754 = vrcp.pop %v747
      %v755 = vmul.f32 1.0, %v754
      %v756 = vrcp.pop %v748
      %v757 = vmul.f32 1.0, %v756
      %v758 = vrcp.pop %v749
      %v759 = vmul.f32 1.0, %v758
      %v760 = vrcp.pop %v750
      %v761 = vmul.f32 1.0, %v760
      %v762 = vrcp.pop %v751
      %v763 = vmul.f32 1.0, %v762
      %v764 = vrcp.pop %v752
      %v765 = vmul.f32 1.0, %v764
      %v766 = vrcp.pop %v753
      %v767 = vmul.f32 1.0, %v766
      %v768 = vmul.f32 %v755, %v402
      %v769 = vmul.f32 %v757, %v403
      %v770 = vmul.f32 %v759, %v404
      %v771 = vmul.f32 %v761, %v405
      %v772 = vmul.f32 %v763, %v406
      %v773 = vmul.f32 %v765, %v407
      %v774 = vmul.f32 %v767, %v408
      %v776 = vrot.slane %v774, 5
      %v784 = vrot.slane %v768, 7
      %v785 = vrot.slane %v769, 7
      %v786 = vsel %vm425, %v784, %v785
      %v787 = vrot.slane %v770, 7
      %v788 = vsel %vm425, %v785, %v787
      %v789 = vrot.slane %v771, 7
      %v790 = vsel %vm425, %v787, %v789
      %v791 = vrot.slane %v772, 7
      %v792 = vsel %vm425, %v789, %v791
      %v793 = vrot.slane %v773, 7
      %v794 = vsel %vm425, %v791, %v793
      %v795 = vrot.slane %v774, 7
      %v796 = vsel %vm425, %v793, %v795
      %v804 = vsel %vm425, %v776, %v784
      %v805 = vmul.f32 %v804, %v450
      %v806 = vmul.f32 %v786, %v455
      %v807 = vmul.f32 %v788, %v460
      %v808 = vmul.f32 %v790, %v465
      %v809 = vmul.f32 %v792, %v470
      %v810 = vmul.f32 %v794, %v475
      %v811 = vmul.f32 %v796, %v480
      %v812 = vrot.slane %v768, 1
      %v813 = vrot.slane %v769, 1
      %v814 = vsel %vm489, %v812, %v813
      %v815 = vrot.slane %v770, 1
      %v816 = vsel %vm489, %v813, %v815
      %v817 = vrot.slane %v771, 1
      %v818 = vsel %vm489, %v815, %v817
      %v819 = vrot.slane %v772, 1
      %v820 = vsel %vm489, %v817, %v819
      %v821 = vrot.slane %v773, 1
      %v822 = vsel %vm489, %v819, %v821
      %v823 = vrot.slane %v774, 1
      %v824 = vsel %vm489, %v821, %v823
      %v832 = vrot.slane %v768, 3
      %v834 = vsel %vm512, %v823, %v832
      %v835 = vmul.f32 %v814, %v516
      %v836 = vmul.f32 %v816, %v520
      %v837 = vmul.f32 %v818, %v524
      %v838 = vmul.f32 %v820, %v528
      %v839 = vmul.f32 %v822, %v532
      %v840 = vmul.f32 %v824, %v536
      %v841 = vmul.f32 %v834, %v540
      %842 = vrot.lane.b32.xlu0 %v768, 16
      %v843 = vpop.permute.xlu0 %842
      %844 = vrot.lane.b32.xlu0 %v769, 16
      %v845 = vpop.permute.xlu0 %844
      %846 = vrot.lane.b32.xlu0 %v770, 16
      %v847 = vpop.permute.xlu0 %846
      %848 = vrot.lane.b32.xlu0 %v771, 16
      %v849 = vpop.permute.xlu0 %848
      %850 = vrot.lane.b32.xlu0 %v772, 16
      %v851 = vpop.permute.xlu0 %850
      %852 = vrot.lane.b32.xlu0 %v773, 16
      %v853 = vpop.permute.xlu0 %852
      %854 = vrot.lane.b32.xlu0 %v774, 16
      %v855 = vpop.permute.xlu0 %854
      %870 = vrot.lane.b32.xlu0 %v835, 32
      %v871 = vpop.permute.xlu0 %870
      %872 = vrot.lane.b32.xlu0 %v836, 32
      %v873 = vpop.permute.xlu0 %872
      %874 = vrot.lane.b32.xlu0 %v837, 32
      %v875 = vpop.permute.xlu0 %874
      %876 = vrot.lane.b32.xlu0 %v838, 32
      %v877 = vpop.permute.xlu0 %876
      %878 = vrot.lane.b32.xlu0 %v839, 32
      %v879 = vpop.permute.xlu0 %878
      %880 = vrot.lane.b32.xlu0 %v840, 32
      %v881 = vpop.permute.xlu0 %880
      %882 = vrot.lane.b32.xlu0 %v841, 32
      %v883 = vpop.permute.xlu0 %882
      %v891 = vsel %vm598, %v805, %v843
      %v892 = vsel %vm598, %v806, %v845
      %v893 = vsel %vm598, %v807, %v847
      %v894 = vsel %vm598, %v808, %v849
      %v895 = vsel %vm598, %v809, %v851
      %v896 = vsel %vm598, %v810, %v853
      %v897 = vsel %vm598, %v811, %v855
      %v898 = vsel %vm606, %v891, %v871
      %v899 = vsel %vm606, %v892, %v873
      %v900 = vsel %vm606, %v893, %v875
      %v901 = vsel %vm606, %v894, %v877
      %v902 = vsel %vm606, %v895, %v879
      %v903 = vsel %vm606, %v896, %v881
      %v904 = vsel %vm606, %v897, %v883
      %v905 = vpack.c.bf16 %v899, %v898
      %v906 = vpack.c.bf16 %v901, %v900
      %v907 = vpack.c.bf16 %v903, %v902
      %v908 = vpack.c.bf16 %v904, %v904
      %v909 = vld [vmem:[%s6] sm:$0xf]
      %v910 = vld [vmem:[%s6 + $0x4] sm:$0xf]
      %v911 = vld [vmem:[%s6 + $0x8] sm:$0xf]
      %v912 = vld [vmem:[%s6 + $0xc] sm:$0xf]
      %v913 = vld [vmem:[%s6 + $0x10] sm:$0xf]
      %v914 = vld [vmem:[%s6 + $0x14] sm:$0xf]
      %v921 = vunpack.c.l.b16 %v909
      %v922 = vunpack.c.l.b16 %v910
      %v923 = vunpack.c.l.b16 %v911
      %v924 = vunpack.c.l.b16 %v912
      %v925 = vunpack.c.l.b16 %v913
      %v926 = vunpack.c.l.b16 %v914
      %v927 = vpack.c.b16 %v922, %v921
      %v928 = vpack.c.b16 %v924, %v923
      %v929 = vpack.c.b16 %v926, %v925
      %v934 = vsel %vm642, %v905, 0
      %v937 = vsel %vm642, %v906, 0
      %v940 = vsel %vm642, %v907, 0
      %v943 = vsel %vm642, %v908, 0
      %945 = vmatprep.subr.bf16.mxu0 0
      %946 = vmatpush1.bf16.msra.mxu0 %v927
      %947 = vmatprep.subr.bf16.mxu0 0
      %948 = vmatpush1.bf16.msra.mxu0 %v928
      %949 = vmatprep.subr.bf16.mxu0 0
      %950 = vmatpush1.bf16.msra.mxu0 %v929
      %951 = vmatprep.subr.bf16.mxu0 0
      %952 = vmatpush1.bf16.msra.mxu0 0
      %953 = vmatprep.subr.bf16.mxu0 0
      %954 = vmatpush1.bf16.msra.mxu0 0
      %955 = vmatprep.subr.bf16.mxu0 0
      %956 = vmatpush1.bf16.msra.mxu0 0
      %957 = vmatprep.subr.bf16.mxu0 0
      %958 = vmatpush1.bf16.msra.mxu0 0
      %959 = vmatprep.subr.bf16.mxu0 0
      %960 = vmatpush1.bf16.msra.mxu0 0
      %961 = vmatprep.subr.bf16.mxu0 0
      %962 = vmatpush1.bf16.msra.mxu0 0
      %963 = vmatprep.subr.bf16.mxu0 0
      %964 = vmatpush1.bf16.msra.mxu0 0
      %965 = vmatprep.subr.bf16.mxu0 0
      %966 = vmatpush1.bf16.msra.mxu0 0
      %967 = vmatprep.subr.bf16.mxu0 0
      %968 = vmatpush1.bf16.msra.mxu0 0
      %969 = vmatprep.subr.bf16.mxu0 0
      %970 = vmatpush1.bf16.msra.mxu0 0
      %971 = vmatprep.subr.bf16.mxu0 0
      %972 = vmatpush1.bf16.msra.mxu0 0
      %973 = vmatprep.subr.bf16.mxu0 0
      %974 = vmatpush1.bf16.msra.mxu0 0
      %975 = vmatprep.subr.bf16.mxu0 0
      %976 = vmatpush1.bf16.msra.mxu0 0
      %977 = vmatprep.mubr.bf16.mxu0 0
      %978 = vmatmul.mubr.bf16.gmra.mrb[0].mxu0 %v934
      %v979 = vpop.f32.mrb[0].mxu0
      %v980 = vadd.f32 0.0, %v979
      %v981 = vpop.f32.mrb[0].mxu0
      %v982 = vpop.f32.mrb[0].mxu0
      %v983 = vadd.f32 0.0, %v982
      %v984 = vpop.f32.mrb[0].mxu0
      %985 = vmatprep.mubr.bf16.mxu0 0
      %986 = vmatmul.mubr.bf16.gmra.mrb[0].mxu0 %v937
      %v987 = vpop.f32.mrb[0].mxu0
      %v988 = vadd.f32 0.0, %v987
      %v989 = vpop.f32.mrb[0].mxu0
      %v990 = vpop.f32.mrb[0].mxu0
      %v991 = vadd.f32 0.0, %v990
      %v992 = vpop.f32.mrb[0].mxu0
      %993 = vmatprep.mubr.bf16.mxu0 0
      %994 = vmatmul.mubr.bf16.gmra.mrb[0].mxu0 %v940
      %v995 = vpop.f32.mrb[0].mxu0
      %v996 = vadd.f32 0.0, %v995
      %v997 = vpop.f32.mrb[0].mxu0
      %v998 = vpop.f32.mrb[0].mxu0
      %v999 = vadd.f32 0.0, %v998
      %v1000 = vpop.f32.mrb[0].mxu0
      %1001 = vmatprep.mubr.bf16.mxu0 0
      %1002 = vmatmul.mubr.bf16.gmra.mrb[0].mxu0 %v943
      %v1003 = vpop.f32.mrb[0].mxu0
      %v1004 = vadd.f32 0.0, %v1003
      %v1005 = vpop.f32.mrb[0].mxu0
      %v1006 = vpop.f32.mrb[0].mxu0
      %v1007 = vpop.f32.mrb[0].mxu0
      %1008 = vdwg.mxu0
      %1016 = vrot.lane.b32.xlu0 %v980, 32
      %v1017 = vpop.permute.xlu0 %1016
      %1018 = vrot.lane.b32.xlu0 %v983, 32
      %v1019 = vpop.permute.xlu0 %1018
      %1020 = vrot.lane.b32.xlu0 %v988, 32
      %v1021 = vpop.permute.xlu0 %1020
      %1022 = vrot.lane.b32.xlu0 %v991, 32
      %v1023 = vpop.permute.xlu0 %1022
      %1024 = vrot.lane.b32.xlu0 %v996, 32
      %v1025 = vpop.permute.xlu0 %1024
      %1026 = vrot.lane.b32.xlu0 %v999, 32
      %v1027 = vpop.permute.xlu0 %1026
      %1028 = vrot.lane.b32.xlu0 %v1004, 32
      %v1029 = vpop.permute.xlu0 %1028
      %v1037 = vadd.f32 %v409, %v1017
      %v1038 = vadd.f32 %v410, %v1019
      %v1039 = vadd.f32 %v411, %v1021
      %v1040 = vadd.f32 %v412, %v1023
      %v1041 = vadd.f32 %v413, %v1025
      %v1042 = vadd.f32 %v414, %v1027
      %v1043 = vadd.f32 %v415, %v1029
      %v1044 = vsub.f32 1.0, %v755
      %v1045 = vsub.f32 1.0, %v757
      %v1046 = vsub.f32 1.0, %v759
      %v1047 = vsub.f32 1.0, %v761
      %v1048 = vsub.f32 1.0, %v763
      %v1049 = vsub.f32 1.0, %v765
      %v1050 = vsub.f32 1.0, %v767
      %v1051 = vmul.f32 %v1044, %v550
      %v1052 = vmul.f32 %v1045, %v552
      %v1053 = vmul.f32 %v1046, %v554
      %v1054 = vmul.f32 %v1047, %v556
      %v1055 = vmul.f32 %v1048, %v558
      %v1056 = vmul.f32 %v1049, %v560
      %v1057 = vmul.f32 %v1050, %v562
      %1065 = vrot.lane.b32.xlu0 %v1037, 112
      %v1066 = vpop.permute.xlu0 %1065
      %1067 = vrot.lane.b32.xlu0 %v1038, 112
      %v1068 = vpop.permute.xlu0 %1067
      %1069 = vrot.lane.b32.xlu0 %v1039, 112
      %v1070 = vpop.permute.xlu0 %1069
      %1071 = vrot.lane.b32.xlu0 %v1040, 112
      %v1072 = vpop.permute.xlu0 %1071
      %1073 = vrot.lane.b32.xlu0 %v1041, 112
      %v1074 = vpop.permute.xlu0 %1073
      %1075 = vrot.lane.b32.xlu0 %v1042, 112
      %v1076 = vpop.permute.xlu0 %1075
      %1077 = vrot.lane.b32.xlu0 %v1043, 112
      %v1078 = vpop.permute.xlu0 %1077
      %v1086 = vmul.f32 %v755, %v1066
      %v1087 = vmul.f32 %v757, %v1068
      %v1088 = vmul.f32 %v759, %v1070
      %v1089 = vmul.f32 %v761, %v1072
      %v1090 = vmul.f32 %v763, %v1074
      %v1091 = vmul.f32 %v765, %v1076
      %v1092 = vmul.f32 %v767, %v1078
      %v1093 = vadd.f32 %v1051, %v1086
      %v1094 = vadd.f32 %v1052, %v1087
      %v1095 = vadd.f32 %v1053, %v1088
      %v1096 = vadd.f32 %v1054, %v1089
      %v1097 = vadd.f32 %v1055, %v1090
      %v1098 = vadd.f32 %v1056, %v1091
      %v1099 = vadd.f32 %v1057, %v1092
      %v1100 = vmin.f32 %v1093, 20.0
      %v1101 = vmin.f32 %v1094, 20.0
      %v1102 = vmin.f32 %v1095, 20.0
      %v1103 = vmin.f32 %v1096, 20.0
      %v1104 = vmin.f32 %v1097, 20.0
      %v1105 = vmin.f32 %v1098, 20.0
      %v1106 = vmin.f32 %v1099, 20.0
      %v1107 = vmul.f32 %v1100, 1.442695
      %v1108 = vpow.pop %v1107
      %v1109 = vmul.f32 %v1101, 1.442695
      %v1110 = vpow.pop %v1109
      %v1111 = vmul.f32 %v1102, 1.442695
      %v1112 = vpow.pop %v1111
      %v1113 = vmul.f32 %v1103, 1.442695
      %v1114 = vpow.pop %v1113
      %v1115 = vmul.f32 %v1104, 1.442695
      %v1116 = vpow.pop %v1115
      %v1117 = vmul.f32 %v1105, 1.442695
      %v1118 = vpow.pop %v1117
      %v1119 = vmul.f32 %v1106, 1.442695
      %v1120 = vpow.pop %v1119
      %v1121 = vadd.f32 %v1108, 2.0
      %v1122 = vadd.f32 %v1110, 2.0
      %v1123 = vadd.f32 %v1112, 2.0
      %v1124 = vadd.f32 %v1114, 2.0
      %v1125 = vadd.f32 %v1116, 2.0
      %v1126 = vadd.f32 %v1118, 2.0
      %v1127 = vadd.f32 %v1120, 2.0
      %v1128 = vmul.f32 %v1108, %v1121
      %v1129 = vmul.f32 %v1110, %v1122
      %v1130 = vmul.f32 %v1112, %v1123
      %v1131 = vmul.f32 %v1114, %v1124
      %v1132 = vmul.f32 %v1116, %v1125
      %v1133 = vmul.f32 %v1118, %v1126
      %v1134 = vmul.f32 %v1120, %v1127
      %vm1135 = vcmp.gt.f32.partialorder %v1093, 20.0
      %vm1136 = vcmp.gt.f32.partialorder %v1094, 20.0
      %vm1137 = vcmp.gt.f32.partialorder %v1095, 20.0
      %vm1138 = vcmp.gt.f32.partialorder %v1096, 20.0
      %vm1139 = vcmp.gt.f32.partialorder %v1097, 20.0
      %vm1140 = vcmp.gt.f32.partialorder %v1098, 20.0
      %vm1141 = vcmp.gt.f32.partialorder %v1099, 20.0
      %v1142 = vadd.f32 %v1128, 2.0
      %v1143 = vadd.f32 %v1129, 2.0
      %v1144 = vadd.f32 %v1130, 2.0
      %v1145 = vadd.f32 %v1131, 2.0
      %v1146 = vadd.f32 %v1132, 2.0
      %v1147 = vadd.f32 %v1133, 2.0
      %v1148 = vadd.f32 %v1134, 2.0
      %v1149 = vrcp.pop %v1142
      %v1150 = vrcp.pop %v1143
      %v1151 = vrcp.pop %v1144
      %v1152 = vrcp.pop %v1145
      %v1153 = vrcp.pop %v1146
      %v1154 = vrcp.pop %v1147
      %v1155 = vrcp.pop %v1148
      %v1156 = vmul.f32 %v1128, %v1149
      %v1157 = vmul.f32 %v1129, %v1150
      %v1158 = vmul.f32 %v1130, %v1151
      %v1159 = vmul.f32 %v1131, %v1152
      %v1160 = vmul.f32 %v1132, %v1153
      %v1161 = vmul.f32 %v1133, %v1154
      %v1162 = vmul.f32 %v1134, %v1155
      %v1163 = vmul.f32 %v1093, %v1156
      %v1164 = vmul.f32 %v1094, %v1157
      %v1165 = vmul.f32 %v1095, %v1158
      %v1166 = vmul.f32 %v1096, %v1159
      %v1167 = vmul.f32 %v1097, %v1160
      %v1168 = vmul.f32 %v1098, %v1161
      %v1169 = vmul.f32 %v1099, %v1162
      %v1170 = vsel %vm1135, %v1093, %v1163
      %v1171 = vsel %vm1136, %v1094, %v1164
      %v1172 = vsel %vm1137, %v1095, %v1165
      %v1173 = vsel %vm1138, %v1096, %v1166
      %v1174 = vsel %vm1139, %v1097, %v1167
      %v1175 = vsel %vm1140, %v1098, %v1168
      %v1176 = vsel %vm1141, %v1099, %v1169
      %v1177 = vmul.f32 %v1170, %v1170
      %v1178 = vmul.f32 %v1171, %v1171
      %v1179 = vmul.f32 %v1172, %v1172
      %v1180 = vmul.f32 %v1173, %v1173
      %v1181 = vmul.f32 %v1174, %v1174
      %v1182 = vmul.f32 %v1175, %v1175
      %v1183 = vmul.f32 %v1176, %v1176
      %1191 = vrot.lane.b32.xlu0 %v1170, 112
      %v1192 = vpop.permute.xlu0 %1191
      %1193 = vrot.lane.b32.xlu0 %v1171, 112
      %v1194 = vpop.permute.xlu0 %1193
      %1195 = vrot.lane.b32.xlu0 %v1172, 112
      %v1196 = vpop.permute.xlu0 %1195
      %1197 = vrot.lane.b32.xlu0 %v1173, 112
      %v1198 = vpop.permute.xlu0 %1197
      %1199 = vrot.lane.b32.xlu0 %v1174, 112
      %v1200 = vpop.permute.xlu0 %1199
      %1201 = vrot.lane.b32.xlu0 %v1175, 112
      %v1202 = vpop.permute.xlu0 %1201
      %1203 = vrot.lane.b32.xlu0 %v1176, 112
      %v1204 = vpop.permute.xlu0 %1203
      %v1212 = vsel %vm598, %v1192, %v1177
      %v1213 = vsel %vm598, %v1194, %v1178
      %v1214 = vsel %vm598, %v1196, %v1179
      %v1215 = vsel %vm598, %v1198, %v1180
      %v1216 = vsel %vm598, %v1200, %v1181
      %v1217 = vsel %vm598, %v1202, %v1182
      %v1218 = vsel %vm598, %v1204, %v1183
      %v1219 = vsel %vm606, %v1212, 0.0
      %v1220 = vsel %vm606, %v1213, 0.0
      %v1221 = vadd.f32 %v1219, %v1220
      %v1222 = vsel %vm606, %v1214, 0.0
      %v1223 = vadd.f32 %v1221, %v1222
      %v1224 = vsel %vm606, %v1215, 0.0
      %v1225 = vadd.f32 %v1223, %v1224
      %v1226 = vsel %vm606, %v1216, 0.0
      %v1227 = vadd.f32 %v1225, %v1226
      %v1228 = vsel %vm606, %v1217, 0.0
      %v1229 = vadd.f32 %v1227, %v1228
      %vm1230 = vcmask 259072
      %v1231 = vsel %vm1230, %v1218, 0.0
      %v1232 = vadd.f32 %v1229, %v1231
      %v1233 = vrot.slane %v1232, 4
      %v1234 = vadd.f32 %v1232, %v1233
      %v1235 = vrot.slane %v1234, 2
      %v1236 = vadd.f32 %v1234, %v1235
      %v1237 = vrot.slane %v1236, 1
      %v1238 = vadd.f32 %v1236, %v1237
      %v1239 = vmul.f32 %v1238, 0.018518519
      %v1240 = vmul.f32 %v1239, %v1239
      %1242 = vrot.lane.b32.xlu0 %v1240, 16
      %v1243 = vpop.permute.xlu0 %1242
      %v1245 = vsub.f32 %v1239, %v1243
      %v1246 = vmax.f32 %v1245, 0.0
      %1248 = vrot.lane.b32.xlu0 %v1239, 16
      %v1249 = vpop.permute.xlu0 %1248
      %v1251 = vsub.f32 %v1170, %v1249
      %v1252 = vsub.f32 %v1171, %v1249
      %v1253 = vsub.f32 %v1172, %v1249
      %v1254 = vsub.f32 %v1173, %v1249
      %v1255 = vsub.f32 %v1174, %v1249
      %v1256 = vsub.f32 %v1175, %v1249
      %v1257 = vsub.f32 %v1176, %v1249
      %v1258 = vadd.f32 %v1246, 1e-05
      %v1259 = vrsqrt.pop %v1258
      %v1260 = vlaneseq
      %v1261 = vshrl.u32 %v1260, 7
      %v1262 = vsub.s32 0, %v1261
      %v1263 = vrot.slane %v1259, %v1262
      %v1264 = vmul.f32 %v1251, %v1263
      %v1265 = vmul.f32 %v1252, %v1263
      %v1266 = vmul.f32 %v1253, %v1263
      %v1267 = vmul.f32 %v1254, %v1263
      %v1268 = vmul.f32 %v1255, %v1263
      %v1269 = vmul.f32 %v1256, %v1263
      %v1270 = vmul.f32 %v1257, %v1263
      %v1272 = vlaneseq
      %v1273 = vshrl.u32 %v1272, 7
      %v1274 = vsub.s32 0, %v1273
      %v1275 = vrot.slane %v394, %v1274
      %1276 = vrot.lane.b32.xlu0 %v1275, 16
      %v1277 = vpop.permute.xlu0 %1276
      %v1279 = vmul.f32 %v1264, %v1277
      %v1280 = vmul.f32 %v1265, %v1277
      %v1281 = vmul.f32 %v1266, %v1277
      %v1282 = vmul.f32 %v1267, %v1277
      %v1283 = vmul.f32 %v1268, %v1277
      %v1284 = vmul.f32 %v1269, %v1277
      %v1285 = vmul.f32 %v1270, %v1277
      %v1287 = vadd.f32 %v1279, %v1275
      %v1288 = vadd.f32 %v1280, %v1275
      %v1289 = vadd.f32 %v1281, %v1275
      %v1290 = vadd.f32 %v1282, %v1275
      %v1291 = vadd.f32 %v1283, %v1275
      %v1292 = vadd.f32 %v1284, %v1275
      %v1293 = vadd.f32 %v1285, %v1275
      %1301 = vrot.lane.b32.xlu0 %v1287, 112
      %v1302 = vpop.permute.xlu0 %1301
      %1303 = vrot.lane.b32.xlu0 %v1288, 112
      %v1304 = vpop.permute.xlu0 %1303
      %1305 = vrot.lane.b32.xlu0 %v1289, 112
      %v1306 = vpop.permute.xlu0 %1305
      %1307 = vrot.lane.b32.xlu0 %v1290, 112
      %v1308 = vpop.permute.xlu0 %1307
      %1309 = vrot.lane.b32.xlu0 %v1291, 112
      %v1310 = vpop.permute.xlu0 %1309
      %1311 = vrot.lane.b32.xlu0 %v1292, 112
      %v1312 = vpop.permute.xlu0 %1311
      %1313 = vrot.lane.b32.xlu0 %v1293, 112
      %v1314 = vpop.permute.xlu0 %1313
      %1322 = vst.msk [vmem:[#allocation2] sm:$0xff] %vm598, %v1302
      %1323 = vst.msk [vmem:[#allocation2 + $0x8] sm:$0xff] %vm598, %v1304
      %1324 = vst.msk [vmem:[#allocation2 + $0x10] sm:$0xff] %vm598, %v1306
      %1325 = vst.msk [vmem:[#allocation2 + $0x18] sm:$0xff] %vm598, %v1308
      %1326 = vst.msk [vmem:[#allocation2 + $0x20] sm:$0xff] %vm598, %v1310
      %1327 = vst.msk [vmem:[#allocation2 + $0x28] sm:$0xff] %vm598, %v1312
      %vm1328 = vcmask 128000
      %1329 = vst.msk [vmem:[#allocation2 + $0x30] sm:$0x3f] %vm1328, %v1314
      %v1330 = vld [vmem:[#allocation3] sm:$0xff]
      %v1331 = vld [vmem:[#allocation3 + $0x8] sm:$0xff]
      %v1332 = vld [vmem:[#allocation3 + $0x10] sm:$0xff]
      %v1333 = vld [vmem:[#allocation3 + $0x18] sm:$0xff]
      %v1334 = vld [vmem:[#allocation3 + $0x20] sm:$0xff]
      %v1335 = vld [vmem:[#allocation3 + $0x28] sm:$0xff]
      %v1336 = vld [vmem:[#allocation3 + $0x30] sm:$0x3f]
      %1344 = vrot.lane.b32.xlu0 %v1330, 16
      %v1345 = vpop.permute.xlu0 %1344
      %1346 = vrot.lane.b32.xlu0 %v1331, 16
      %v1347 = vpop.permute.xlu0 %1346
      %1348 = vrot.lane.b32.xlu0 %v1332, 16
      %v1349 = vpop.permute.xlu0 %1348
      %1350 = vrot.lane.b32.xlu0 %v1333, 16
      %v1351 = vpop.permute.xlu0 %1350
      %1352 = vrot.lane.b32.xlu0 %v1334, 16
      %v1353 = vpop.permute.xlu0 %1352
      %1354 = vrot.lane.b32.xlu0 %v1335, 16
      %v1355 = vpop.permute.xlu0 %1354
      %1356 = vrot.lane.b32.xlu0 %v1336, 16
      %v1357 = vpop.permute.xlu0 %1356
      %v1365 = vsel %vm598, %v1302, %v1345
      %v1366 = vsel %vm598, %v1304, %v1347
      %v1367 = vsel %vm598, %v1306, %v1349
      %v1368 = vsel %vm598, %v1308, %v1351
      %v1369 = vsel %vm598, %v1310, %v1353
      %v1370 = vsel %vm598, %v1312, %v1355
      %v1371 = vsel %vm598, %v1314, %v1357
      %v1373 = vrot.slane %v1371, 5
      %v1381 = vrot.slane %v1365, 7
      %v1382 = vrot.slane %v1366, 7
      %v1383 = vsel %vm425, %v1381, %v1382
      %v1384 = vrot.slane %v1367, 7
      %v1385 = vsel %vm425, %v1382, %v1384
      %v1386 = vrot.slane %v1368, 7
      %v1387 = vsel %vm425, %v1384, %v1386
      %v1388 = vrot.slane %v1369, 7
      %v1389 = vsel %vm425, %v1386, %v1388
      %v1390 = vrot.slane %v1370, 7
      %v1391 = vsel %vm425, %v1388, %v1390
      %v1392 = vrot.slane %v1371, 7
      %v1393 = vsel %vm425, %v1390, %v1392
      %v1401 = vsel %vm425, %v1373, %v1381
      %v1402 = vmul.f32 %v1401, %v450
      %v1403 = vmul.f32 %v1383, %v455
      %v1404 = vmul.f32 %v1385, %v460
      %v1405 = vmul.f32 %v1387, %v465
      %v1406 = vmul.f32 %v1389, %v470
      %v1407 = vmul.f32 %v1391, %v475
      %v1408 = vmul.f32 %v1393, %v480
      %v1409 = vrot.slane %v1365, 1
      %v1410 = vrot.slane %v1366, 1
      %v1411 = vsel %vm489, %v1409, %v1410
      %v1412 = vrot.slane %v1367, 1
      %v1413 = vsel %vm489, %v1410, %v1412
      %v1414 = vrot.slane %v1368, 1
      %v1415 = vsel %vm489, %v1412, %v1414
      %v1416 = vrot.slane %v1369, 1
      %v1417 = vsel %vm489, %v1414, %v1416
      %v1418 = vrot.slane %v1370, 1
      %v1419 = vsel %vm489, %v1416, %v1418
      %v1420 = vrot.slane %v1371, 1
      %v1421 = vsel %vm489, %v1418, %v1420
      %v1429 = vrot.slane %v1365, 3
      %v1431 = vsel %vm512, %v1420, %v1429
      %v1432 = vmul.f32 %v1411, %v516
      %v1433 = vmul.f32 %v1413, %v520
      %v1434 = vmul.f32 %v1415, %v524
      %v1435 = vmul.f32 %v1417, %v528
      %v1436 = vmul.f32 %v1419, %v532
      %v1437 = vmul.f32 %v1421, %v536
      %v1438 = vmul.f32 %v1431, %v540
      %1439 = vrot.lane.b32.xlu0 %v1365, 32
      %v1440 = vpop.permute.xlu0 %1439
      %1441 = vrot.lane.b32.xlu0 %v1366, 32
      %v1442 = vpop.permute.xlu0 %1441
      %1443 = vrot.lane.b32.xlu0 %v1367, 32
      %v1444 = vpop.permute.xlu0 %1443
      %1445 = vrot.lane.b32.xlu0 %v1368, 32
      %v1446 = vpop.permute.xlu0 %1445
      %1447 = vrot.lane.b32.xlu0 %v1369, 32
      %v1448 = vpop.permute.xlu0 %1447
      %1449 = vrot.lane.b32.xlu0 %v1370, 32
      %v1450 = vpop.permute.xlu0 %1449
      %1451 = vrot.lane.b32.xlu0 %v1371, 32
      %v1452 = vpop.permute.xlu0 %1451
      %1467 = vrot.lane.b32.xlu0 %v1432, 64
      %v1468 = vpop.permute.xlu0 %1467
      %1469 = vrot.lane.b32.xlu0 %v1433, 64
      %v1470 = vpop.permute.xlu0 %1469
      %1471 = vrot.lane.b32.xlu0 %v1434, 64
      %v1472 = vpop.permute.xlu0 %1471
      %1473 = vrot.lane.b32.xlu0 %v1435, 64
      %v1474 = vpop.permute.xlu0 %1473
      %1475 = vrot.lane.b32.xlu0 %v1436, 64
      %v1476 = vpop.permute.xlu0 %1475
      %1477 = vrot.lane.b32.xlu0 %v1437, 64
      %v1478 = vpop.permute.xlu0 %1477
      %1479 = vrot.lane.b32.xlu0 %v1438, 64
      %v1480 = vpop.permute.xlu0 %1479
      %v1488 = vsel %vm606, %v1402, %v1440
      %v1489 = vsel %vm606, %v1403, %v1442
      %v1490 = vsel %vm606, %v1404, %v1444
      %v1491 = vsel %vm606, %v1405, %v1446
      %v1492 = vsel %vm606, %v1406, %v1448
      %v1493 = vsel %vm606, %v1407, %v1450
      %v1494 = vsel %vm606, %v1408, %v1452
      %vm1495 = vcmask 523264
      %v1496 = vsel %vm1495, %v1488, %v1468
      %v1497 = vsel %vm1495, %v1489, %v1470
      %v1498 = vsel %vm1495, %v1490, %v1472
      %v1499 = vsel %vm1495, %v1491, %v1474
      %v1500 = vsel %vm1495, %v1492, %v1476
      %v1501 = vsel %vm1495, %v1493, %v1478
      %v1502 = vsel %vm1495, %v1494, %v1480
      %v1503 = vpack.c.bf16 %v1497, %v1496
      %v1504 = vpack.c.bf16 %v1499, %v1498
      %v1505 = vpack.c.bf16 %v1501, %v1500
      %v1506 = vpack.c.bf16 %v1502, %v1502
      %v1507 = vld [vmem:[%s7] sm:$0xf]
      %v1508 = vld [vmem:[%s7 + $0x4] sm:$0xf]
      %v1509 = vld [vmem:[%s7 + $0x8] sm:$0xf]
      %v1510 = vld [vmem:[%s7 + $0xc] sm:$0xf]
      %v1511 = vld [vmem:[%s7 + $0x10] sm:$0xf]
      %v1512 = vld [vmem:[%s7 + $0x14] sm:$0xf]
      %v1513 = vld [vmem:[%s7 + $0x18] sm:$0xf]
      %v1514 = vld [vmem:[%s7 + $0x1c] sm:$0xf]
      %v1515 = vld [vmem:[%s7 + $0x20] sm:$0xf]
      %v1516 = vld [vmem:[%s7 + $0x24] sm:$0xf]
      %v1517 = vld [vmem:[%s7 + $0x28] sm:$0xf]
      %v1518 = vld [vmem:[%s7 + $0x2c] sm:$0xf]
      %v1531 = vunpack.c.l.b16 %v1507
      %v1532 = vunpack.c.l.b16 %v1508
      %v1533 = vunpack.c.l.b16 %v1509
      %v1534 = vunpack.c.l.b16 %v1510
      %v1535 = vunpack.c.l.b16 %v1511
      %v1536 = vunpack.c.l.b16 %v1512
      %v1537 = vunpack.c.l.b16 %v1513
      %v1538 = vunpack.c.l.b16 %v1514
      %v1539 = vunpack.c.l.b16 %v1515
      %v1540 = vunpack.c.l.b16 %v1516
      %v1541 = vunpack.c.l.b16 %v1517
      %v1542 = vunpack.c.l.b16 %v1518
      %v1543 = vpack.c.b16 %v1532, %v1531
      %v1544 = vpack.c.b16 %v1534, %v1533
      %v1545 = vpack.c.b16 %v1536, %v1535
      %v1546 = vpack.c.b16 %v1538, %v1537
      %v1547 = vpack.c.b16 %v1540, %v1539
      %v1548 = vpack.c.b16 %v1542, %v1541
      %vm1555 = vcmask 785408
      %v1557 = vsel %vm1555, %v1503, 0
      %v1560 = vsel %vm1555, %v1504, 0
      %v1563 = vsel %vm1555, %v1505, 0
      %v1566 = vsel %vm1555, %v1506, 0
      %1568 = vmatprep.subr.bf16.mxu0 0
      %1569 = vmatpush1.bf16.msra.mxu0 %v1543
      %1570 = vmatprep.subr.bf16.mxu0 0
      %1571 = vmatpush1.bf16.msra.mxu0 %v1544
      %1572 = vmatprep.subr.bf16.mxu0 0
      %1573 = vmatpush1.bf16.msra.mxu0 %v1545
      %1574 = vmatprep.subr.bf16.mxu0 0
      %1575 = vmatpush1.bf16.msra.mxu0 %v1546
      %1576 = vmatprep.subr.bf16.mxu0 0
      %1577 = vmatpush1.bf16.msra.mxu0 %v1547
      %1578 = vmatprep.subr.bf16.mxu0 0
      %1579 = vmatpush1.bf16.msra.mxu0 %v1548
      %1580 = vmatprep.subr.bf16.mxu0 0
      %1581 = vmatpush1.bf16.msra.mxu0 0
      %1582 = vmatprep.subr.bf16.mxu0 0
      %1583 = vmatpush1.bf16.msra.mxu0 0
      %1584 = vmatprep.subr.bf16.mxu0 0
      %1585 = vmatpush1.bf16.msra.mxu0 0
      %1586 = vmatprep.subr.bf16.mxu0 0
      %1587 = vmatpush1.bf16.msra.mxu0 0
      %1588 = vmatprep.subr.bf16.mxu0 0
      %1589 = vmatpush1.bf16.msra.mxu0 0
      %1590 = vmatprep.subr.bf16.mxu0 0
      %1591 = vmatpush1.bf16.msra.mxu0 0
      %1592 = vmatprep.subr.bf16.mxu0 0
      %1593 = vmatpush1.bf16.msra.mxu0 0
      %1594 = vmatprep.subr.bf16.mxu0 0
      %1595 = vmatpush1.bf16.msra.mxu0 0
      %1596 = vmatprep.subr.bf16.mxu0 0
      %1597 = vmatpush1.bf16.msra.mxu0 0
      %1598 = vmatprep.subr.bf16.mxu0 0
      %1599 = vmatpush1.bf16.msra.mxu0 0
      %1600 = vmatprep.mubr.bf16.mxu0 0
      %1601 = vmatmul.mubr.bf16.gmra.mrb[0].mxu0 %v1557
      %v1602 = vpop.f32.mrb[0].mxu0
      %v1603 = vadd.f32 0.0, %v1602
      %v1604 = vpop.f32.mrb[0].mxu0
      %v1605 = vpop.f32.mrb[0].mxu0
      %v1606 = vadd.f32 0.0, %v1605
      %v1607 = vpop.f32.mrb[0].mxu0
      %1608 = vmatprep.mubr.bf16.mxu0 0
      %1609 = vmatmul.mubr.bf16.gmra.mrb[0].mxu0 %v1560
      %v1610 = vpop.f32.mrb[0].mxu0
      %v1611 = vadd.f32 0.0, %v1610
      %v1612 = vpop.f32.mrb[0].mxu0
      %v1613 = vpop.f32.mrb[0].mxu0
      %v1614 = vadd.f32 0.0, %v1613
      %v1615 = vpop.f32.mrb[0].mxu0
      %1616 = vmatprep.mubr.bf16.mxu0 0
      %1617 = vmatmul.mubr.bf16.gmra.mrb[0].mxu0 %v1563
      %v1618 = vpop.f32.mrb[0].mxu0
      %v1619 = vadd.f32 0.0, %v1618
      %v1620 = vpop.f32.mrb[0].mxu0
      %v1621 = vpop.f32.mrb[0].mxu0
      %v1622 = vadd.f32 0.0, %v1621
      %v1623 = vpop.f32.mrb[0].mxu0
      %1624 = vmatprep.mubr.bf16.mxu0 0
      %1625 = vmatmul.mubr.bf16.gmra.mrb[0].mxu0 %v1566
      %v1626 = vpop.f32.mrb[0].mxu0
      %v1627 = vadd.f32 0.0, %v1626
      %v1628 = vpop.f32.mrb[0].mxu0
      %v1629 = vpop.f32.mrb[0].mxu0
      %v1630 = vpop.f32.mrb[0].mxu0
      %1631 = vdwg.mxu0
      %1632 = vrot.lane.b32.xlu0 %v1275, 64
      %v1633 = vpop.permute.xlu0 %1632
      %v1635 = vadd.f32 %v1603, %v1633
      %v1636 = vadd.f32 %v1606, %v1633
      %v1637 = vadd.f32 %v1611, %v1633
      %v1638 = vadd.f32 %v1614, %v1633
      %v1639 = vadd.f32 %v1619, %v1633
      %v1640 = vadd.f32 %v1622, %v1633
      %v1641 = vadd.f32 %v1627, %v1633
      %v1642 = vxor.u32 %v1635, 2147483648
      %v1643 = vxor.u32 %v1636, 2147483648
      %v1644 = vxor.u32 %v1637, 2147483648
      %v1645 = vxor.u32 %v1638, 2147483648
      %v1646 = vxor.u32 %v1639, 2147483648
      %v1647 = vxor.u32 %v1640, 2147483648
      %v1648 = vxor.u32 %v1641, 2147483648
      %v1649 = vmul.f32 %v1642, 1.442695
      %v1650 = vpow.pop %v1649
      %v1651 = vmul.f32 %v1643, 1.442695
      %v1652 = vpow.pop %v1651
      %v1653 = vmul.f32 %v1644, 1.442695
      %v1654 = vpow.pop %v1653
      %v1655 = vmul.f32 %v1645, 1.442695
      %v1656 = vpow.pop %v1655
      %v1657 = vmul.f32 %v1646, 1.442695
      %v1658 = vpow.pop %v1657
      %v1659 = vmul.f32 %v1647, 1.442695
      %v1660 = vpow.pop %v1659
      %v1661 = vmul.f32 %v1648, 1.442695
      %v1662 = vpow.pop %v1661
      %v1663 = vadd.f32 %v1650, 1.0
      %v1664 = vadd.f32 %v1652, 1.0
      %v1665 = vadd.f32 %v1654, 1.0
      %v1666 = vadd.f32 %v1656, 1.0
      %v1667 = vadd.f32 %v1658, 1.0
      %v1668 = vadd.f32 %v1660, 1.0
      %v1669 = vadd.f32 %v1662, 1.0
      %v1670 = vrcp.pop %v1663
      %v1671 = vmul.f32 1.0, %v1670
      %v1672 = vrcp.pop %v1664
      %v1673 = vmul.f32 1.0, %v1672
      %v1674 = vrcp.pop %v1665
      %v1675 = vmul.f32 1.0, %v1674
      %v1676 = vrcp.pop %v1666
      %v1677 = vmul.f32 1.0, %v1676
      %v1678 = vrcp.pop %v1667
      %v1679 = vmul.f32 1.0, %v1678
      %v1680 = vrcp.pop %v1668
      %v1681 = vmul.f32 1.0, %v1680
      %v1682 = vrcp.pop %v1669
      %v1683 = vmul.f32 1.0, %v1682
      %1691 = vrot.lane.b32.xlu0 %v395, 32
      %v1692 = vpop.permute.xlu0 %1691
      %1693 = vrot.lane.b32.xlu0 %v396, 32
      %v1694 = vpop.permute.xlu0 %1693
      %1695 = vrot.lane.b32.xlu0 %v397, 32
      %v1696 = vpop.permute.xlu0 %1695
      %1697 = vrot.lane.b32.xlu0 %v398, 32
      %v1698 = vpop.permute.xlu0 %1697
      %1699 = vrot.lane.b32.xlu0 %v399, 32
      %v1700 = vpop.permute.xlu0 %1699
      %1701 = vrot.lane.b32.xlu0 %v400, 32
      %v1702 = vpop.permute.xlu0 %1701
      %1703 = vrot.lane.b32.xlu0 %v401, 32
      %v1704 = vpop.permute.xlu0 %1703
      %v1712 = vadd.f32 %v1603, %v1692
      %v1713 = vadd.f32 %v1606, %v1694
      %v1714 = vadd.f32 %v1611, %v1696
      %v1715 = vadd.f32 %v1614, %v1698
      %v1716 = vadd.f32 %v1619, %v1700
      %v1717 = vadd.f32 %v1622, %v1702
      %v1718 = vadd.f32 %v1627, %v1704
      %v1719 = vmul.f32 %v1671, %v1330
      %v1720 = vmul.f32 %v1673, %v1331
      %v1721 = vmul.f32 %v1675, %v1332
      %v1722 = vmul.f32 %v1677, %v1333
      %v1723 = vmul.f32 %v1679, %v1334
      %v1724 = vmul.f32 %v1681, %v1335
      %v1725 = vmul.f32 %v1683, %v1336
      %v1727 = vrot.slane %v1725, 5
      %v1735 = vrot.slane %v1719, 7
      %v1736 = vrot.slane %v1720, 7
      %v1737 = vsel %vm425, %v1735, %v1736
      %v1738 = vrot.slane %v1721, 7
      %v1739 = vsel %vm425, %v1736, %v1738
      %v1740 = vrot.slane %v1722, 7
      %v1741 = vsel %vm425, %v1738, %v1740
      %v1742 = vrot.slane %v1723, 7
      %v1743 = vsel %vm425, %v1740, %v1742
      %v1744 = vrot.slane %v1724, 7
      %v1745 = vsel %vm425, %v1742, %v1744
      %v1746 = vrot.slane %v1725, 7
      %v1747 = vsel %vm425, %v1744, %v1746
      %v1755 = vsel %vm425, %v1727, %v1735
      %v1756 = vmul.f32 %v1755, %v450
      %v1757 = vmul.f32 %v1737, %v455
      %v1758 = vmul.f32 %v1739, %v460
      %v1759 = vmul.f32 %v1741, %v465
      %v1760 = vmul.f32 %v1743, %v470
      %v1761 = vmul.f32 %v1745, %v475
      %v1762 = vmul.f32 %v1747, %v480
      %v1763 = vrot.slane %v1719, 1
      %v1764 = vrot.slane %v1720, 1
      %v1765 = vsel %vm489, %v1763, %v1764
      %v1766 = vrot.slane %v1721, 1
      %v1767 = vsel %vm489, %v1764, %v1766
      %v1768 = vrot.slane %v1722, 1
      %v1769 = vsel %vm489, %v1766, %v1768
      %v1770 = vrot.slane %v1723, 1
      %v1771 = vsel %vm489, %v1768, %v1770
      %v1772 = vrot.slane %v1724, 1
      %v1773 = vsel %vm489, %v1770, %v1772
      %v1774 = vrot.slane %v1725, 1
      %v1775 = vsel %vm489, %v1772, %v1774
      %v1783 = vrot.slane %v1719, 3
      %v1785 = vsel %vm512, %v1774, %v1783
      %v1786 = vmul.f32 %v1765, %v516
      %v1787 = vmul.f32 %v1767, %v520
      %v1788 = vmul.f32 %v1769, %v524
      %v1789 = vmul.f32 %v1771, %v528
      %v1790 = vmul.f32 %v1773, %v532
      %v1791 = vmul.f32 %v1775, %v536
      %v1792 = vmul.f32 %v1785, %v540
      %1793 = vrot.lane.b32.xlu0 %v1719, 16
      %v1794 = vpop.permute.xlu0 %1793
      %1795 = vrot.lane.b32.xlu0 %v1720, 16
      %v1796 = vpop.permute.xlu0 %1795
      %1797 = vrot.lane.b32.xlu0 %v1721, 16
      %v1798 = vpop.permute.xlu0 %1797
      %1799 = vrot.lane.b32.xlu0 %v1722, 16
      %v1800 = vpop.permute.xlu0 %1799
      %1801 = vrot.lane.b32.xlu0 %v1723, 16
      %v1802 = vpop.permute.xlu0 %1801
      %1803 = vrot.lane.b32.xlu0 %v1724, 16
      %v1804 = vpop.permute.xlu0 %1803
      %1805 = vrot.lane.b32.xlu0 %v1725, 16
      %v1806 = vpop.permute.xlu0 %1805
      %1821 = vrot.lane.b32.xlu0 %v1786, 32
      %v1822 = vpop.permute.xlu0 %1821
      %1823 = vrot.lane.b32.xlu0 %v1787, 32
      %v1824 = vpop.permute.xlu0 %1823
      %1825 = vrot.lane.b32.xlu0 %v1788, 32
      %v1826 = vpop.permute.xlu0 %1825
      %1827 = vrot.lane.b32.xlu0 %v1789, 32
      %v1828 = vpop.permute.xlu0 %1827
      %1829 = vrot.lane.b32.xlu0 %v1790, 32
      %v1830 = vpop.permute.xlu0 %1829
      %1831 = vrot.lane.b32.xlu0 %v1791, 32
      %v1832 = vpop.permute.xlu0 %1831
      %1833 = vrot.lane.b32.xlu0 %v1792, 32
      %v1834 = vpop.permute.xlu0 %1833
      %v1842 = vsel %vm598, %v1756, %v1794
      %v1843 = vsel %vm598, %v1757, %v1796
      %v1844 = vsel %vm598, %v1758, %v1798
      %v1845 = vsel %vm598, %v1759, %v1800
      %v1846 = vsel %vm598, %v1760, %v1802
      %v1847 = vsel %vm598, %v1761, %v1804
      %v1848 = vsel %vm598, %v1762, %v1806
      %v1849 = vsel %vm606, %v1842, %v1822
      %v1850 = vsel %vm606, %v1843, %v1824
      %v1851 = vsel %vm606, %v1844, %v1826
      %v1852 = vsel %vm606, %v1845, %v1828
      %v1853 = vsel %vm606, %v1846, %v1830
      %v1854 = vsel %vm606, %v1847, %v1832
      %v1855 = vsel %vm606, %v1848, %v1834
      %v1856 = vpack.c.bf16 %v1850, %v1849
      %v1857 = vpack.c.bf16 %v1852, %v1851
      %v1858 = vpack.c.bf16 %v1854, %v1853
      %v1859 = vpack.c.bf16 %v1855, %v1855
      %v1860 = vld [vmem:[%s8] sm:$0xf]
      %v1861 = vld [vmem:[%s8 + $0x4] sm:$0xf]
      %v1862 = vld [vmem:[%s8 + $0x8] sm:$0xf]
      %v1863 = vld [vmem:[%s8 + $0xc] sm:$0xf]
      %v1864 = vld [vmem:[%s8 + $0x10] sm:$0xf]
      %v1865 = vld [vmem:[%s8 + $0x14] sm:$0xf]
      %v1872 = vunpack.c.l.b16 %v1860
      %v1873 = vunpack.c.l.b16 %v1861
      %v1874 = vunpack.c.l.b16 %v1862
      %v1875 = vunpack.c.l.b16 %v1863
      %v1876 = vunpack.c.l.b16 %v1864
      %v1877 = vunpack.c.l.b16 %v1865
      %v1878 = vpack.c.b16 %v1873, %v1872
      %v1879 = vpack.c.b16 %v1875, %v1874
      %v1880 = vpack.c.b16 %v1877, %v1876
      %v1885 = vsel %vm642, %v1856, 0
      %v1888 = vsel %vm642, %v1857, 0
      %v1891 = vsel %vm642, %v1858, 0
      %v1894 = vsel %vm642, %v1859, 0
      %1896 = vmatprep.subr.bf16.mxu0 0
      %1897 = vmatpush1.bf16.msra.mxu0 %v1878
      %1898 = vmatprep.subr.bf16.mxu0 0
      %1899 = vmatpush1.bf16.msra.mxu0 %v1879
      %1900 = vmatprep.subr.bf16.mxu0 0
      %1901 = vmatpush1.bf16.msra.mxu0 %v1880
      %1902 = vmatprep.subr.bf16.mxu0 0
      %1903 = vmatpush1.bf16.msra.mxu0 0
      %1904 = vmatprep.subr.bf16.mxu0 0
      %1905 = vmatpush1.bf16.msra.mxu0 0
      %1906 = vmatprep.subr.bf16.mxu0 0
      %1907 = vmatpush1.bf16.msra.mxu0 0
      %1908 = vmatprep.subr.bf16.mxu0 0
      %1909 = vmatpush1.bf16.msra.mxu0 0
      %1910 = vmatprep.subr.bf16.mxu0 0
      %1911 = vmatpush1.bf16.msra.mxu0 0
      %1912 = vmatprep.subr.bf16.mxu0 0
      %1913 = vmatpush1.bf16.msra.mxu0 0
      %1914 = vmatprep.subr.bf16.mxu0 0
      %1915 = vmatpush1.bf16.msra.mxu0 0
      %1916 = vmatprep.subr.bf16.mxu0 0
      %1917 = vmatpush1.bf16.msra.mxu0 0
      %1918 = vmatprep.subr.bf16.mxu0 0
      %1919 = vmatpush1.bf16.msra.mxu0 0
      %1920 = vmatprep.subr.bf16.mxu0 0
      %1921 = vmatpush1.bf16.msra.mxu0 0
      %1922 = vmatprep.subr.bf16.mxu0 0
      %1923 = vmatpush1.bf16.msra.mxu0 0
      %1924 = vmatprep.subr.bf16.mxu0 0
      %1925 = vmatpush1.bf16.msra.mxu0 0
      %1926 = vmatprep.subr.bf16.mxu0 0
      %1927 = vmatpush1.bf16.msra.mxu0 0
      %1928 = vmatprep.mubr.bf16.mxu0 0
      %1929 = vmatmul.mubr.bf16.gmra.mrb[0].mxu0 %v1885
      %v1930 = vpop.f32.mrb[0].mxu0
      %v1931 = vadd.f32 0.0, %v1930
      %v1932 = vpop.f32.mrb[0].mxu0
      %v1933 = vpop.f32.mrb[0].mxu0
      %v1934 = vadd.f32 0.0, %v1933
      %v1935 = vpop.f32.mrb[0].mxu0
      %1936 = vmatprep.mubr.bf16.mxu0 0
      %1937 = vmatmul.mubr.bf16.gmra.mrb[0].mxu0 %v1888
      %v1938 = vpop.f32.mrb[0].mxu0
      %v1939 = vadd.f32 0.0, %v1938
      %v1940 = vpop.f32.mrb[0].mxu0
      %v1941 = vpop.f32.mrb[0].mxu0
      %v1942 = vadd.f32 0.0, %v1941
      %v1943 = vpop.f32.mrb[0].mxu0
      %1944 = vmatprep.mubr.bf16.mxu0 0
      %1945 = vmatmul.mubr.bf16.gmra.mrb[0].mxu0 %v1891
      %v1946 = vpop.f32.mrb[0].mxu0
      %v1947 = vadd.f32 0.0, %v1946
      %v1948 = vpop.f32.mrb[0].mxu0
      %v1949 = vpop.f32.mrb[0].mxu0
      %v1950 = vadd.f32 0.0, %v1949
      %v1951 = vpop.f32.mrb[0].mxu0
      %1952 = vmatprep.mubr.bf16.mxu0 0
      %1953 = vmatmul.mubr.bf16.gmra.mrb[0].mxu0 %v1894
      %v1954 = vpop.f32.mrb[0].mxu0
      %v1955 = vadd.f32 0.0, %v1954
      %v1956 = vpop.f32.mrb[0].mxu0
      %v1957 = vpop.f32.mrb[0].mxu0
      %v1958 = vpop.f32.mrb[0].mxu0
      %1959 = vdwg.mxu0
      %1967 = vrot.lane.b32.xlu0 %v1931, 32
      %v1968 = vpop.permute.xlu0 %1967
      %1969 = vrot.lane.b32.xlu0 %v1934, 32
      %v1970 = vpop.permute.xlu0 %1969
      %1971 = vrot.lane.b32.xlu0 %v1939, 32
      %v1972 = vpop.permute.xlu0 %1971
      %1973 = vrot.lane.b32.xlu0 %v1942, 32
      %v1974 = vpop.permute.xlu0 %1973
      %1975 = vrot.lane.b32.xlu0 %v1947, 32
      %v1976 = vpop.permute.xlu0 %1975
      %1977 = vrot.lane.b32.xlu0 %v1950, 32
      %v1978 = vpop.permute.xlu0 %1977
      %1979 = vrot.lane.b32.xlu0 %v1955, 32
      %v1980 = vpop.permute.xlu0 %1979
      %v1988 = vadd.f32 %v1712, %v1968
      %v1989 = vadd.f32 %v1713, %v1970
      %v1990 = vadd.f32 %v1714, %v1972
      %v1991 = vadd.f32 %v1715, %v1974
      %v1992 = vadd.f32 %v1716, %v1976
      %v1993 = vadd.f32 %v1717, %v1978
      %v1994 = vadd.f32 %v1718, %v1980
      %v1995 = vsub.f32 1.0, %v1671
      %v1996 = vsub.f32 1.0, %v1673
      %v1997 = vsub.f32 1.0, %v1675
      %v1998 = vsub.f32 1.0, %v1677
      %v1999 = vsub.f32 1.0, %v1679
      %v2000 = vsub.f32 1.0, %v1681
      %v2001 = vsub.f32 1.0, %v1683
      %v2002 = vmul.f32 %v1995, %v1345
      %v2003 = vmul.f32 %v1996, %v1347
      %v2004 = vmul.f32 %v1997, %v1349
      %v2005 = vmul.f32 %v1998, %v1351
      %v2006 = vmul.f32 %v1999, %v1353
      %v2007 = vmul.f32 %v2000, %v1355
      %v2008 = vmul.f32 %v2001, %v1357
      %2016 = vrot.lane.b32.xlu0 %v1988, 112
      %v2017 = vpop.permute.xlu0 %2016
      %2018 = vrot.lane.b32.xlu0 %v1989, 112
      %v2019 = vpop.permute.xlu0 %2018
      %2020 = vrot.lane.b32.xlu0 %v1990, 112
      %v2021 = vpop.permute.xlu0 %2020
      %2022 = vrot.lane.b32.xlu0 %v1991, 112
      %v2023 = vpop.permute.xlu0 %2022
      %2024 = vrot.lane.b32.xlu0 %v1992, 112
      %v2025 = vpop.permute.xlu0 %2024
      %2026 = vrot.lane.b32.xlu0 %v1993, 112
      %v2027 = vpop.permute.xlu0 %2026
      %2028 = vrot.lane.b32.xlu0 %v1994, 112
      %v2029 = vpop.permute.xlu0 %2028
      %v2037 = vmul.f32 %v1671, %v2017
      %v2038 = vmul.f32 %v1673, %v2019
      %v2039 = vmul.f32 %v1675, %v2021
      %v2040 = vmul.f32 %v1677, %v2023
      %v2041 = vmul.f32 %v1679, %v2025
      %v2042 = vmul.f32 %v1681, %v2027
      %v2043 = vmul.f32 %v1683, %v2029
      %v2044 = vadd.f32 %v2002, %v2037
      %v2045 = vadd.f32 %v2003, %v2038
      %v2046 = vadd.f32 %v2004, %v2039
      %v2047 = vadd.f32 %v2005, %v2040
      %v2048 = vadd.f32 %v2006, %v2041
      %v2049 = vadd.f32 %v2007, %v2042
      %v2050 = vadd.f32 %v2008, %v2043
      %v2051 = vmin.f32 %v2044, 20.0
      %v2052 = vmin.f32 %v2045, 20.0
      %v2053 = vmin.f32 %v2046, 20.0
      %v2054 = vmin.f32 %v2047, 20.0
      %v2055 = vmin.f32 %v2048, 20.0
      %v2056 = vmin.f32 %v2049, 20.0
      %v2057 = vmin.f32 %v2050, 20.0
      %v2058 = vmul.f32 %v2051, 1.442695
      %v2059 = vpow.pop %v2058
      %v2060 = vmul.f32 %v2052, 1.442695
      %v2061 = vpow.pop %v2060
      %v2062 = vmul.f32 %v2053, 1.442695
      %v2063 = vpow.pop %v2062
      %v2064 = vmul.f32 %v2054, 1.442695
      %v2065 = vpow.pop %v2064
      %v2066 = vmul.f32 %v2055, 1.442695
      %v2067 = vpow.pop %v2066
      %v2068 = vmul.f32 %v2056, 1.442695
      %v2069 = vpow.pop %v2068
      %v2070 = vmul.f32 %v2057, 1.442695
      %v2071 = vpow.pop %v2070
      %v2072 = vadd.f32 %v2059, 2.0
      %v2073 = vadd.f32 %v2061, 2.0
      %v2074 = vadd.f32 %v2063, 2.0
      %v2075 = vadd.f32 %v2065, 2.0
      %v2076 = vadd.f32 %v2067, 2.0
      %v2077 = vadd.f32 %v2069, 2.0
      %v2078 = vadd.f32 %v2071, 2.0
      %v2079 = vmul.f32 %v2059, %v2072
      %v2080 = vmul.f32 %v2061, %v2073
      %v2081 = vmul.f32 %v2063, %v2074
      %v2082 = vmul.f32 %v2065, %v2075
      %v2083 = vmul.f32 %v2067, %v2076
      %v2084 = vmul.f32 %v2069, %v2077
      %v2085 = vmul.f32 %v2071, %v2078
      %vm2086 = vcmp.gt.f32.partialorder %v2044, 20.0
      %vm2087 = vcmp.gt.f32.partialorder %v2045, 20.0
      %vm2088 = vcmp.gt.f32.partialorder %v2046, 20.0
      %vm2089 = vcmp.gt.f32.partialorder %v2047, 20.0
      %vm2090 = vcmp.gt.f32.partialorder %v2048, 20.0
      %vm2091 = vcmp.gt.f32.partialorder %v2049, 20.0
      %vm2092 = vcmp.gt.f32.partialorder %v2050, 20.0
      %v2093 = vadd.f32 %v2079, 2.0
      %v2094 = vadd.f32 %v2080, 2.0
      %v2095 = vadd.f32 %v2081, 2.0
      %v2096 = vadd.f32 %v2082, 2.0
      %v2097 = vadd.f32 %v2083, 2.0
      %v2098 = vadd.f32 %v2084, 2.0
      %v2099 = vadd.f32 %v2085, 2.0
      %v2100 = vrcp.pop %v2093
      %v2101 = vrcp.pop %v2094
      %v2102 = vrcp.pop %v2095
      %v2103 = vrcp.pop %v2096
      %v2104 = vrcp.pop %v2097
      %v2105 = vrcp.pop %v2098
      %v2106 = vrcp.pop %v2099
      %v2107 = vmul.f32 %v2079, %v2100
      %v2108 = vmul.f32 %v2080, %v2101
      %v2109 = vmul.f32 %v2081, %v2102
      %v2110 = vmul.f32 %v2082, %v2103
      %v2111 = vmul.f32 %v2083, %v2104
      %v2112 = vmul.f32 %v2084, %v2105
      %v2113 = vmul.f32 %v2085, %v2106
      %v2114 = vmul.f32 %v2044, %v2107
      %v2115 = vmul.f32 %v2045, %v2108
      %v2116 = vmul.f32 %v2046, %v2109
      %v2117 = vmul.f32 %v2047, %v2110
      %v2118 = vmul.f32 %v2048, %v2111
      %v2119 = vmul.f32 %v2049, %v2112
      %v2120 = vmul.f32 %v2050, %v2113
      %v2121 = vsel %vm2086, %v2044, %v2114
      %v2122 = vsel %vm2087, %v2045, %v2115
      %v2123 = vsel %vm2088, %v2046, %v2116
      %v2124 = vsel %vm2089, %v2047, %v2117
      %v2125 = vsel %vm2090, %v2048, %v2118
      %v2126 = vsel %vm2091, %v2049, %v2119
      %v2127 = vsel %vm2092, %v2050, %v2120
      %v2128 = vmul.f32 %v2121, %v2121
      %v2129 = vmul.f32 %v2122, %v2122
      %v2130 = vmul.f32 %v2123, %v2123
      %v2131 = vmul.f32 %v2124, %v2124
      %v2132 = vmul.f32 %v2125, %v2125
      %v2133 = vmul.f32 %v2126, %v2126
      %v2134 = vmul.f32 %v2127, %v2127
      %2142 = vrot.lane.b32.xlu0 %v2121, 112
      %v2143 = vpop.permute.xlu0 %2142
      %2144 = vrot.lane.b32.xlu0 %v2122, 112
      %v2145 = vpop.permute.xlu0 %2144
      %2146 = vrot.lane.b32.xlu0 %v2123, 112
      %v2147 = vpop.permute.xlu0 %2146
      %2148 = vrot.lane.b32.xlu0 %v2124, 112
      %v2149 = vpop.permute.xlu0 %2148
      %2150 = vrot.lane.b32.xlu0 %v2125, 112
      %v2151 = vpop.permute.xlu0 %2150
      %2152 = vrot.lane.b32.xlu0 %v2126, 112
      %v2153 = vpop.permute.xlu0 %2152
      %2154 = vrot.lane.b32.xlu0 %v2127, 112
      %v2155 = vpop.permute.xlu0 %2154
      %v2163 = vsel %vm598, %v2143, %v2128
      %v2164 = vsel %vm598, %v2145, %v2129
      %v2165 = vsel %vm598, %v2147, %v2130
      %v2166 = vsel %vm598, %v2149, %v2131
      %v2167 = vsel %vm598, %v2151, %v2132
      %v2168 = vsel %vm598, %v2153, %v2133
      %v2169 = vsel %vm598, %v2155, %v2134
      %v2170 = vsel %vm606, %v2163, 0.0
      %v2171 = vsel %vm606, %v2164, 0.0
      %v2172 = vadd.f32 %v2170, %v2171
      %v2173 = vsel %vm606, %v2165, 0.0
      %v2174 = vadd.f32 %v2172, %v2173
      %v2175 = vsel %vm606, %v2166, 0.0
      %v2176 = vadd.f32 %v2174, %v2175
      %v2177 = vsel %vm606, %v2167, 0.0
      %v2178 = vadd.f32 %v2176, %v2177
      %v2179 = vsel %vm606, %v2168, 0.0
      %v2180 = vadd.f32 %v2178, %v2179
      %v2181 = vsel %vm1230, %v2169, 0.0
      %v2182 = vadd.f32 %v2180, %v2181
      %v2183 = vrot.slane %v2182, 4
      %v2184 = vadd.f32 %v2182, %v2183
      %v2185 = vrot.slane %v2184, 2
      %v2186 = vadd.f32 %v2184, %v2185
      %v2187 = vrot.slane %v2186, 1
      %v2188 = vadd.f32 %v2186, %v2187
      %v2189 = vmul.f32 %v2188, 0.018518519
      %v2190 = vmul.f32 %v2189, %v2189
      %2192 = vrot.lane.b32.xlu0 %v2190, 16
      %v2193 = vpop.permute.xlu0 %2192
      %v2195 = vsub.f32 %v2189, %v2193
      %v2196 = vmax.f32 %v2195, 0.0
      %2198 = vrot.lane.b32.xlu0 %v2189, 16
      %v2199 = vpop.permute.xlu0 %2198
      %v2201 = vsub.f32 %v2121, %v2199
      %v2202 = vsub.f32 %v2122, %v2199
      %v2203 = vsub.f32 %v2123, %v2199
      %v2204 = vsub.f32 %v2124, %v2199
      %v2205 = vsub.f32 %v2125, %v2199
      %v2206 = vsub.f32 %v2126, %v2199
      %v2207 = vsub.f32 %v2127, %v2199
      %v2208 = vadd.f32 %v2196, 1e-05
      %v2209 = vrsqrt.pop %v2208
      %v2210 = vlaneseq
      %v2211 = vshrl.u32 %v2210, 7
      %v2212 = vsub.s32 0, %v2211
      %v2213 = vrot.slane %v2209, %v2212
      %v2214 = vmul.f32 %v2201, %v2213
      %v2215 = vmul.f32 %v2202, %v2213
      %v2216 = vmul.f32 %v2203, %v2213
      %v2217 = vmul.f32 %v2204, %v2213
      %v2218 = vmul.f32 %v2205, %v2213
      %v2219 = vmul.f32 %v2206, %v2213
      %v2220 = vmul.f32 %v2207, %v2213
      %2221 = vrot.lane.b32.xlu0 %v1275, 112
      %v2222 = vpop.permute.xlu0 %2221
      %v2224 = vmul.f32 %v2214, %v2222
      %v2225 = vmul.f32 %v2215, %v2222
      %v2226 = vmul.f32 %v2216, %v2222
      %v2227 = vmul.f32 %v2217, %v2222
      %v2228 = vmul.f32 %v2218, %v2222
      %v2229 = vmul.f32 %v2219, %v2222
      %v2230 = vmul.f32 %v2220, %v2222
      %2231 = vrot.lane.b32.xlu0 %v1275, 96
      %v2232 = vpop.permute.xlu0 %2231
      %v2234 = vadd.f32 %v2224, %v2232
      %v2235 = vadd.f32 %v2225, %v2232
      %v2236 = vadd.f32 %v2226, %v2232
      %v2237 = vadd.f32 %v2227, %v2232
      %v2238 = vadd.f32 %v2228, %v2232
      %v2239 = vadd.f32 %v2229, %v2232
      %v2240 = vadd.f32 %v2230, %v2232
      %2248 = vrot.lane.b32.xlu0 %v2234, 112
      %v2249 = vpop.permute.xlu0 %2248
      %2250 = vrot.lane.b32.xlu0 %v2235, 112
      %v2251 = vpop.permute.xlu0 %2250
      %2252 = vrot.lane.b32.xlu0 %v2236, 112
      %v2253 = vpop.permute.xlu0 %2252
      %2254 = vrot.lane.b32.xlu0 %v2237, 112
      %v2255 = vpop.permute.xlu0 %2254
      %2256 = vrot.lane.b32.xlu0 %v2238, 112
      %v2257 = vpop.permute.xlu0 %2256
      %2258 = vrot.lane.b32.xlu0 %v2239, 112
      %v2259 = vpop.permute.xlu0 %2258
      %2260 = vrot.lane.b32.xlu0 %v2240, 112
      %v2261 = vpop.permute.xlu0 %2260
      %2269 = vst.msk [vmem:[#allocation3] sm:$0xff] %vm598, %v2249
      %2270 = vst.msk [vmem:[#allocation3 + $0x8] sm:$0xff] %vm598, %v2251
      %2271 = vst.msk [vmem:[#allocation3 + $0x10] sm:$0xff] %vm598, %v2253
      %2272 = vst.msk [vmem:[#allocation3 + $0x18] sm:$0xff] %vm598, %v2255
      %2273 = vst.msk [vmem:[#allocation3 + $0x20] sm:$0xff] %vm598, %v2257
      %2274 = vst.msk [vmem:[#allocation3 + $0x28] sm:$0xff] %vm598, %v2259
      %2275 = vst.msk [vmem:[#allocation3 + $0x30] sm:$0x3f] %vm1328, %v2261
      %p2276 = scmp.ge.s32.totalorder %s20, 2
      // Predicated region
      $region61: #{_lambda_.1} parent=55 // pred_check
        %p2277 = pneg %p2276
      $region62: #{_lambda_.1} parent=55 // pred_check_branch
        %2279 = sbr.rel (%p2277) target = $region64
      $region63: #{_lambda_.1} parent=55 // pred_region
        %2280 = vrot.lane.b32.xlu0 %v387, 14
        %v2281 = vpop.permute.xlu0 %2280
        %2282 = vrot.lane.b32.xlu0 %v388, 14
        %v2283 = vpop.permute.xlu0 %2282
        %2284 = vrot.lane.b32.xlu0 %v389, 14
        %v2285 = vpop.permute.xlu0 %2284
        %2286 = vrot.lane.b32.xlu0 %v390, 14
        %v2287 = vpop.permute.xlu0 %2286
        %2288 = vrot.lane.b32.xlu0 %v391, 14
        %v2289 = vpop.permute.xlu0 %2288
        %2290 = vrot.lane.b32.xlu0 %v392, 14
        %v2291 = vpop.permute.xlu0 %2290
        %2292 = vrot.lane.b32.xlu0 %v393, 14
        %v2293 = vpop.permute.xlu0 %2292
        %v2301 = vmul.f32 %v2234, %v2281
        %v2302 = vmul.f32 %v2235, %v2283
        %v2303 = vmul.f32 %v2236, %v2285
        %v2304 = vmul.f32 %v2237, %v2287
        %v2305 = vmul.f32 %v2238, %v2289
        %v2306 = vmul.f32 %v2239, %v2291
        %v2307 = vmul.f32 %v2240, %v2293
        %v2308 = vld [vmem:[%s3] sm:$0x3]
        %2316 = vrot.lane.b32.xlu0 %v2301, 112
        %v2317 = vpop.permute.xlu0 %2316
        %2318 = vrot.lane.b32.xlu0 %v2302, 112
        %v2319 = vpop.permute.xlu0 %2318
        %2320 = vrot.lane.b32.xlu0 %v2303, 112
        %v2321 = vpop.permute.xlu0 %2320
        %2322 = vrot.lane.b32.xlu0 %v2304, 112
        %v2323 = vpop.permute.xlu0 %2322
        %2324 = vrot.lane.b32.xlu0 %v2305, 112
        %v2325 = vpop.permute.xlu0 %2324
        %2326 = vrot.lane.b32.xlu0 %v2306, 112
        %v2327 = vpop.permute.xlu0 %2326
        %2328 = vrot.lane.b32.xlu0 %v2307, 112
        %v2329 = vpop.permute.xlu0 %2328
        %vm2336 = vcmask 441344
        %v2338 = vsel %vm2336, %v2308, 0
        %vm2340 = vcmask 1045504
        %v2341 = vsel %vm2340, %v2329, 0
        %2343 = vmatprep.subr.mxu0 0.0
        %2344 = vmatpush1.msra.mxu0 %v2317
        %2345 = vmatprep.subr.mxu0 0.0
        %2346 = vmatpush1.msra.mxu0 %v2319
        %2347 = vmatprep.subr.mxu0 0.0
        %2348 = vmatpush1.msra.mxu0 %v2321
        %2349 = vmatprep.subr.mxu0 0.0
        %2350 = vmatpush1.msra.mxu0 %v2323
        %2351 = vmatprep.subr.mxu0 0.0
        %2352 = vmatpush1.msra.mxu0 %v2325
        %2353 = vmatprep.subr.mxu0 0.0
        %2354 = vmatpush1.msra.mxu0 %v2327
        %2355 = vmatprep.subr.mxu0 0.0
        %2356 = vmatpush1.msra.mxu0 %v2341
        %2357 = vmatprep.subr.mxu0 0.0
        %2358 = vmatpush1.msra.mxu0 0.0
        %2359 = vmatprep.subr.mxu0 0.0
        %2360 = vmatpush1.msra.mxu0 0.0
        %2361 = vmatprep.subr.mxu0 0.0
        %2362 = vmatpush1.msra.mxu0 0.0
        %2363 = vmatprep.subr.mxu0 0.0
        %2364 = vmatpush1.msra.mxu0 0.0
        %2365 = vmatprep.subr.mxu0 0.0
        %2366 = vmatpush1.msra.mxu0 0.0
        %2367 = vmatprep.subr.mxu0 0.0
        %2368 = vmatpush1.msra.mxu0 0.0
        %2369 = vmatprep.subr.mxu0 0.0
        %2370 = vmatpush1.msra.mxu0 0.0
        %2371 = vmatprep.subr.mxu0 0.0
        %2372 = vmatpush1.msra.mxu0 0.0
        %2373 = vmatprep.subr.mxu0 0.0
        %2374 = vmatpush1.msra.mxu0 0.0
        %2375 = vmatprep.subr.mxu0 0.0
        %2376 = vmatpush1.msra.mxu0 0.0
        %2377 = vmatprep.subr.mxu0 0.0
        %2378 = vmatpush1.msra.mxu0 0.0
        %2379 = vmatprep.subr.mxu0 0.0
        %2380 = vmatpush1.msra.mxu0 0.0
        %2381 = vmatprep.subr.mxu0 0.0
        %2382 = vmatpush1.msra.mxu0 0.0
        %2383 = vmatprep.subr.mxu0 0.0
        %2384 = vmatpush1.msra.mxu0 0.0
        %2385 = vmatprep.subr.mxu0 0.0
        %2386 = vmatpush1.msra.mxu0 0.0
        %2387 = vmatprep.subr.mxu0 0.0
        %2388 = vmatpush1.msra.mxu0 0.0
        %2389 = vmatprep.subr.mxu0 0.0
        %2390 = vmatpush1.msra.mxu0 0.0
        %2391 = vmatprep.subr.mxu0 0.0
        %2392 = vmatpush1.msra.mxu0 0.0
        %2393 = vmatprep.subr.mxu0 0.0
        %2394 = vmatpush1.msra.mxu0 0.0
        %2395 = vmatprep.subr.mxu0 0.0
        %2396 = vmatpush1.msra.mxu0 0.0
        %2397 = vmatprep.subr.mxu0 0.0
        %2398 = vmatpush1.msra.mxu0 0.0
        %2399 = vmatprep.subr.mxu0 0.0
        %2400 = vmatpush1.msra.mxu0 0.0
        %2401 = vmatprep.subr.mxu0 0.0
        %2402 = vmatpush1.msra.mxu0 0.0
        %2403 = vmatprep.subr.mxu0 0.0
        %2404 = vmatpush1.msra.mxu0 0.0
        %2405 = vmatprep.subr.mxu0 0.0
        %2406 = vmatpush1.msra.mxu0 0.0
        %2407 = vmatprep.mubr.f32.mxu0 0.0
        %2408 = vmatmul.mubr.f32.gmra.mrb[0].mxu0 %v2338
        %v2409 = vpop.f32.mrb[0].mxu0
        %v2410 = vadd.f32 0.0, %v2409
        %v2411 = vpop.f32.mrb[0].mxu0
        %2412 = vdwg.mxu0
        %vm2413 = vcmask 123904
        %v2414 = vsel %vm2413, %v2410, 0.0
        %2415 = vadd.xlane.f32.xlu0 %v2414
        %v2416 = vpop.xlane.xlu0 %2415
        %vm2417 = vcmask 1024
        %2418 = vst.msk [vmem:[%s362] sm:$0x3] %vm2417, %v2416
      $region64: #{_lambda_.1} parent=55 // pred_fallthru
        _
      %s2419 = ssub.s32 %s20, 2
      %p2420 = scmp.gt.s32.totalorder %s2419, 0
      %s2421 = scalar_select %p2420, %s2419, 0
      %p2422 = scmp.lt.s32.totalorder %s2421, 1
      %s2423 = scalar_select %p2422, %s2421, 1
      %s2424 = smul.addr %s2423, 2
      %s2425 = scalar_lea.vmem %s9, %s2424
      // Predicated region
      $region65: #{_lambda_.1} parent=55 // pred_check
        %p2426 = pneg %p243
      $region66: #{_lambda_.1} parent=55 // pred_check_branch
        %2428 = sbr.rel (%p2426) target = $region68
      $region67: #{_lambda_.1} parent=55 // pred_region
        %s2429 = ssub.s32 %s20, 2
        %p2430 = scmp.gt.s32.totalorder %s2429, 0
        %s2431 = scalar_select %p2430, %s2429, 0
      $region68: #{_lambda_.1} parent=55 // pred_fallthru
        _
    $region56: #{_lambda_.1} parent=5 // pred_fallthru
      _
    %p2432 = scmp.le.s32.totalorder 2, %s15
    // Predicated region
    $region69: #{_lambda_.1} parent=5 // pred_check
      %p2433 = pneg %p2432
    $region70: #{_lambda_.1} parent=5 // pred_check_branch
      %2435 = sbr.rel (%p2433) target = $region72
    $region71: #{_lambda_.1} parent=5 // pred_region
      %s2436 = ssub.s32 %s15, 2
      // Predicated region
      $region73: #{_lambda_.1} parent=71 // pred_check
        %p2437 = pneg %p249
      $region74: #{_lambda_.1} parent=71 // pred_check_branch
        %2439 = sbr.rel (%p2437) target = $region76
      $region75: #{_lambda_.1} parent=71 // pred_region
        %s2440 = ssub.s32 %s21, 2
        %p2441 = scmp.gt.s32.totalorder %s2440, 0
        %s2442 = scalar_select %p2441, %s2440, 0
        %p2443 = scmp.lt.s32.totalorder %s2442, 1
        %s2444 = scalar_select %p2443, %s2442, 1
        %s2445 = smul.addr %s2444, 2
        %s2446 = scalar_lea.vmem %s9, %s2445
      $region76: #{_lambda_.1} parent=71 // pred_fallthru
        _
    $region72: #{_lambda_.1} parent=5 // pred_fallthru
      _
  $region6: #{_lambda_.1} parent=0 // loop_footer
    %s19 = sadd.s32 1, %s15
  $region7: #{_lambda_.1} parent=0 // loop_footer_branch
    %14 = sbr.rel target = $region3
  $region8: #{_lambda_.1} parent=0 // loop_exit
    _

</llo_original>
